<compile_context>
chip_gen: v6e
topology: v6e:2x2x1
jax: 0.10.0
libtpu: 0.0.40
codegen_flags: <defaults>
</compile_context>

<pallas_src>
import functools

import numpy as np
import jax
import jax.numpy as jnp
from jax.experimental import pallas as pl
from jax.experimental.pallas import tpu as pltpu

HIDDEN_IN = 768      # ViT / BERT hidden size
PROJ_DIM = 512       # projection_dim
LN_EPS = 1e-5        # torch.nn.LayerNorm default eps
ROW_TILE = 1024      # rows (tokens) per grid step for large inputs
MASK_LANES = 128     # lane replication width of the per-row mask


def _round_up(x, m):
    return (x + m - 1) // m * m


def _head_kernel(feat_ref, *rest, has_mask):
    """One row tile: y = feat @ W + b ; masked-row blend ; f32 LayerNorm."""
    if has_mask:
        mask_ref, w_ref, consts_ref, out_ref = rest
    else:
        w_ref, consts_ref, out_ref = rest

    # MXU on its native bf16 path, f32 accumulation.  The cast is VPU filler
    # hidden under the HBM-bound pipeline; it's a no-op if features are bf16.
    x = feat_ref[...].astype(jnp.bfloat16)                      # (TM, 768)
    y = jnp.dot(x, w_ref[...], preferred_element_type=jnp.float32)
    y = y + consts_ref[0:1, :]                                  # + bias (f32)

    if has_mask:
        # torch.where(mask[..., None], mask_token, feat) followed by the Linear
        # == blending the pre-projected token row after the matmul (exact).
        pred = mask_ref[:, 0:1].astype(jnp.float32) != 0.0      # (TM, 1)
        y = jnp.where(pred, consts_ref[1:2, :], y)

    # Dropout is identity in eval mode.

    # LayerNorm over the last dim (512): biased variance, eps=1e-5, affine.
    mu = jnp.mean(y, axis=-1, keepdims=True)
    xc = y - mu
    var = jnp.mean(xc * xc, axis=-1, keepdims=True)
    yn = xc * jax.lax.rsqrt(var + LN_EPS)
    out_ref[...] = (yn * consts_ref[2:3, :] + consts_ref[3:4, :]).astype(out_ref.dtype)


def _branch(features, mask, mask_token, w, b, gamma, beta, *, out_dtype=None):
    """features: (B, S, 768) (bf16 or f32); mask: (B, S) bool/int or None.

    Returns (B, S, 512) in `out_dtype` (defaults to the feature dtype).
    """
    B, S, H = features.shape
    assert H == HIDDEN_IN
    rows = B * S
    out_dtype = features.dtype if out_dtype is None else out_dtype
    has_mask = mask is not None

    # Row tile: as large as useful (amortise the ~0.35 us/step overhead, keep
    # the MXU M dim wide), multiple of 32 so every block offset stays aligned
    # for bf16 (16-row) and int8 (32-row) tilings.  Inputs that would fit in
    # <= 2 tiles are split in two so the "parallel" row axis can occupy both
    # v7x TensorCores; tiny inputs fall back to a single full-extent block.
    if rows <= 2 * ROW_TILE:
        half = _round_up(-(-rows // 2), 32)
        rt = half if half < rows else rows
    else:
        rt = ROW_TILE
    grid = (pl.cdiv(rows, rt),)

    feat2d = features.reshape(rows, H)                 # free reshape (row-major)
    w_bf16 = w.astype(jnp.bfloat16)                    # (768, 512), ~0.75 MiB

    # Pre-project the mask token once in f32 (tiny (1,768)@(768,512)) and fold
    # the four (1,512) vectors into one (4,512) constant operand:
    #   row 0: bias, row 1: tok @ W + b, row 2: LN gamma, row 3: LN beta.
    w_f32 = w.astype(jnp.float32)
    b_row = b.reshape(1, PROJ_DIM).astype(jnp.float32)
    tok_proj = mask_token.reshape(1, HIDDEN_IN).astype(jnp.float32) @ w_f32 + b_row
    consts = jnp.concatenate(
        [b_row, tok_proj,
         gamma.reshape(1, PROJ_DIM).astype(jnp.float32),
         beta.reshape(1, PROJ_DIM).astype(jnp.float32)], axis=0)   # (4, 512)

    operands = [feat2d]
    in_specs = [pl.BlockSpec((rt, HIDDEN_IN), lambda i: (i, 0))]
    mask_bytes = 0
    if has_mask:
        # Lane-replicated int8 mask: a (rows, 1) column block would DMA as
        # thousands of 4-byte strided sub-transfers per step; a lane-dense
        # (rt, 128) int8 block is one contiguous tiled DMA (~128 B/row).
        mask_rep = jnp.broadcast_to(
            mask.reshape(rows, 1).astype(jnp.int8), (rows, MASK_LANES))
        operands.append(mask_rep)
        in_specs.append(pl.BlockSpec((rt, MASK_LANES), lambda i: (i, 0)))
        mask_bytes = rows * MASK_LANES
    operands += [w_bf16, consts]
    in_specs += [pl.BlockSpec((HIDDEN_IN, PROJ_DIM), lambda i: (0, 0)),   # W (bf16)
                 pl.BlockSpec((4, PROJ_DIM), lambda i: (0, 0))]           # consts

    out_itemsize = np.dtype(out_dtype).itemsize
    cost = pl.CostEstimate(
        flops=2 * rows * HIDDEN_IN * PROJ_DIM,
        transcendentals=rows,                                   # one rsqrt/row
        bytes_accessed=(rows * HIDDEN_IN * feat2d.dtype.itemsize
                        + mask_bytes
                        + rows * PROJ_DIM * out_itemsize
                        + HIDDEN_IN * PROJ_DIM * 2
                        + 4 * PROJ_DIM * 4))

    out = pl.pallas_call(
        functools.partial(_head_kernel, has_mask=has_mask),
        out_shape=jax.ShapeDtypeStruct((rows, PROJ_DIM), out_dtype),
        grid_spec=pltpu.PrefetchScalarGridSpec(
            num_scalar_prefetch=0,
            grid=grid,
            in_specs=in_specs,
            out_specs=pl.BlockSpec((rt, PROJ_DIM), lambda i: (i, 0)),
        ),
        compiler_params=pltpu.CompilerParams(
            dimension_semantics=("parallel",),     # row tiles shard across TCs
            vmem_limit_bytes=32 * 1024 * 1024),    # keeps rt=1024 safe on v5e too
        cost_estimate=cost,
    )(*operands)

    return out.reshape(B, S, PROJ_DIM)


@jax.jit
def multimodal_encoder_head(image_features, text_features, image_mask,
                            text_mask, params):
    """Mirrors MultimodalEncoder.forward after the frozen backbones (eval)."""
    img_emb = _branch(image_features, image_mask, params["image_mask_token"],
                      params["image_proj_w"], params["image_proj_b"],
                      params["image_ln_g"], params["image_ln_b"])
    txt_emb = _branch(text_features, text_mask, params["text_mask_token"],
                      params["text_proj_w"], params["text_proj_b"],
                      params["text_ln_g"], params["text_ln_b"])
    return img_emb, txt_emb


# ----------------------------- references -----------------------------------

def _reference_module(image_features, text_features, image_mask, text_mask, params):
    """Pure-JAX, full-f32 reference of the PyTorch module's head semantics."""
    def branch(feat, mask, tok, w, b, g, be):
        feat = feat.astype(jnp.float32)
        if mask is not None:
            feat = jnp.where(mask[..., None] != 0, tok.reshape(1, 1, HIDDEN_IN), feat)
        y = feat @ w + b
        mu = jnp.mean(y, axis=-1, keepdims=True)
        var = jnp.mean((y - mu) ** 2, axis=-1, keepdims=True)
        return (y - mu) / jnp.sqrt(var + LN_EPS) * g + be
    return (branch(image_features, image_mask, params["image_mask_token"],
                   params["image_proj_w"], params["image_proj_b"],
                   params["image_ln_g"], params["image_ln_b"]),
            branch(text_features, text_mask, params["text_mask_token"],
                   params["text_proj_w"], params["text_proj_b"],
                   params["text_ln_g"], params["text_ln_b"]))


def _reference_kernel_numerics(features, mask, tok, w, b, g, be, out_dtype):
    """Pure-JAX replica of the kernel's numerics (bf16 matmul, f32 LN/blend)."""
    B, S, _ = features.shape
    y = jnp.dot(features.reshape(-1, HIDDEN_IN).astype(jnp.bfloat16),
                w.astype(jnp.bfloat16),
                preferred_element_type=jnp.float32) + b.astype(jnp.float32)
    tok_proj = (tok.reshape(1, HIDDEN_IN).astype(jnp.float32)
                @ w.astype(jnp.float32) + b.astype(jnp.float32))
    if mask is not None:
        y = jnp.where(mask.reshape(-1, 1) != 0, tok_proj, y)
    mu = jnp.mean(y, axis=-1, keepdims=True)
    xc = y - mu
    var = jnp.mean(xc * xc, axis=-1, keepdims=True)
    out = (xc * jax.lax.rsqrt(var + LN_EPS) * g + be).astype(out_dtype)
    return out.reshape(B, S, PROJ_DIM)


if __name__ == "__main__":
    key = jax.random.PRNGKey(0)
    ks = jax.random.split(key, 10)

    B, S_IMG, S_TXT = 2, 8, 12   # small demo sizes; hidden dims fixed by module

    # Parameters (shapes from MultimodalEncoder.__init__); projection weights
    # are stored (in, out) = (768, 512) for y = x @ W + b.
    params = {
        "image_proj_w": jax.random.normal(ks[0], (HIDDEN_IN, PROJ_DIM), jnp.float32) * 0.02,
        "image_proj_b": jax.random.normal(ks[1], (PROJ_DIM,), jnp.float32) * 0.02,
        "text_proj_w":  jax.random.normal(ks[2], (HIDDEN_IN, PROJ_DIM), jnp.float32) * 0.02,
        "text_proj_b":  jax.random.normal(ks[3], (PROJ_DIM,), jnp.float32) * 0.02,
        "image_ln_g":   jnp.ones((PROJ_DIM,), jnp.float32),
        "image_ln_b":   jnp.zeros((PROJ_DIM,), jnp.float32),
        "text_ln_g":    jnp.ones((PROJ_DIM,), jnp.float32),
        "text_ln_b":    jnp.zeros((PROJ_DIM,), jnp.float32),
        "image_mask_token": jax.random.normal(ks[4], (1, 1, HIDDEN_IN), jnp.float32),
        "text_mask_token":  jax.random.normal(ks[5], (1, 1, HIDDEN_IN), jnp.float32),
    }

    # Backbone outputs (last_hidden_state) as inputs — see TODO(synk) above.
    # Production setup: the backbone emits bf16 directly (cast fused into its
    # final matmul epilogue), halving the head kernel's HBM streams.
    image_features = jax.random.normal(
        ks[6], (B, S_IMG, HIDDEN_IN), jnp.float32).astype(jnp.bfloat16)
    text_features = jax.random.normal(
        ks[7], (B, S_TXT, HIDDEN_IN), jnp.float32).astype(jnp.bfloat16)
    image_mask = jax.random.uniform(ks[8], (B, S_IMG)) < 0.3
    text_mask = jax.random.uniform(ks[9], (B, S_TXT)) < 0.3

    img_emb, txt_emb = multimodal_encoder_head(
        image_features, text_features, image_mask, text_mask, params)
    jax.block_until_ready((img_emb, txt_emb))

    assert img_emb.shape == (B, S_IMG, PROJ_DIM)
    assert txt_emb.shape == (B, S_TXT, PROJ_DIM)

    # (1) Pallas output vs. the same numerics executed by plain XLA.
    kimg = _reference_kernel_numerics(
        image_features, image_mask, params["image_mask_token"],
        params["image_proj_w"], params["image_proj_b"],
        params["image_ln_g"], params["image_ln_b"], img_emb.dtype)
    ktxt = _reference_kernel_numerics(
        text_features, text_mask, params["text_mask_token"],
        params["text_proj_w"], params["text_proj_b"],
        params["text_ln_g"], params["text_ln_b"], txt_emb.dtype)
    assert jnp.allclose(img_emb.astype(jnp.float32), kimg.astype(jnp.float32),
                        atol=3e-2, rtol=3e-2)
    assert jnp.allclose(txt_emb.astype(jnp.float32), ktxt.astype(jnp.float32),
                        atol=3e-2, rtol=3e-2)

    # (2) Closeness to the full-f32 module semantics (only bf16 rounding of the
    #     feature / weight / output operands separates the two).
    rimg, rtxt = _reference_module(
        image_features, text_features, image_mask, text_mask, params)
    assert jnp.allclose(img_emb.astype(jnp.float32), rimg, atol=1e-1, rtol=1e-1)
    assert jnp.allclose(txt_emb.astype(jnp.float32), rtxt, atol=1e-1, rtol=1e-1)

    # (3) No-mask path (image_mask / text_mask default to None in the module).
    img_nm, txt_nm = multimodal_encoder_head(
        image_features, text_features, None, None, params)
    jax.block_until_ready((img_nm, txt_nm))
    rimg_nm, rtxt_nm = _reference_module(
        image_features, text_features, None, None, params)
    assert jnp.allclose(img_nm.astype(jnp.float32), rimg_nm, atol=1e-1, rtol=1e-1)
    assert jnp.allclose(txt_nm.astype(jnp.float32), rtxt_nm, atol=1e-1, rtol=1e-1)

    print("KERNEL_OK")
</pallas_src>

<mosaic_0001>
module attributes {stable_mosaic.version = 11 : i64} {
  func.func @_head_kernel(%arg0: i32, %arg1: memref<24x768xbf16, #tpu.memory_space<vmem>>, %arg2: memref<24x128xi8, #tpu.memory_space<vmem>>, %arg3: memref<768x512xbf16, #tpu.memory_space<vmem>>, %arg4: memref<4x512xf32, #tpu.memory_space<vmem>>, %arg5: memref<24x512xbf16, #tpu.memory_space<vmem>>) attributes {dimension_semantics = [#tpu.dimension_semantics<parallel>], iteration_bounds = array<i64: 1>, scalar_prefetch = 0 : i64, scratch_operands = 0 : i64, tpu.core_type = #tpu.core_type<tc>, window_params = [{transform_indices = @transform_0, window_bounds = array<i64: 24, 768>}, {transform_indices = @transform_1, window_bounds = array<i64: 24, 128>}, {pipeline_mode = #tpu.pipeline_mode<synchronous>, transform_indices = @transform_2, window_bounds = array<i64: 768, 512>}, {pipeline_mode = #tpu.pipeline_mode<synchronous>, transform_indices = @transform_3, window_bounds = array<i64: 4, 512>}, {transform_indices = @transform_4, window_bounds = array<i64: 24, 512>}]} {
    %c0 = arith.constant 0 : index
    %c0_0 = arith.constant 0 : index
    %0 = vector.load %arg1[%c0, %c0_0] : memref<24x768xbf16, #tpu.memory_space<vmem>>, vector<24x768xbf16>
    %c0_1 = arith.constant 0 : index
    %c0_2 = arith.constant 0 : index
    %1 = vector.load %arg3[%c0_1, %c0_2] : memref<768x512xbf16, #tpu.memory_space<vmem>>, vector<768x512xbf16>
    %cst = arith.constant dense<0.000000e+00> : vector<24x512xf32>
    %2 = tpu.matmul %0, %1, %cst {dimension_numbers = #tpu.dot_dimension_numbers<[1], [0], [0], [1], [0, 0, 1, 1], [], []>} : vector<24x768xbf16>, vector<768x512xbf16>, vector<24x512xf32> -> vector<24x512xf32>
    %c0_3 = arith.constant 0 : index
    %c0_4 = arith.constant 0 : index
    %3 = vector.load %arg4[%c0_3, %c0_4] : memref<4x512xf32, #tpu.memory_space<vmem>>, vector<1x512xf32>
    %4 = vector.broadcast %3 : vector<1x512xf32> to vector<24x512xf32>
    %5 = arith.addf %2, %4 : vector<24x512xf32>
    %c0_5 = arith.constant 0 : index
    %c0_6 = arith.constant 0 : index
    %6 = vector.load %arg2[%c0_5, %c0_6] : memref<24x128xi8, #tpu.memory_space<vmem>>, vector<24x1xi8>
    %7 = arith.sitofp %6 : vector<24x1xi8> to vector<24x1xf32>
    %cst_7 = arith.constant 0.000000e+00 : f32
    %8 = vector.broadcast %cst_7 : f32 to vector<24x1xf32>
    %9 = arith.cmpf one, %7, %8 : vector<24x1xf32>
    %c1 = arith.constant 1 : index
    %c0_8 = arith.constant 0 : index
    %10 = vector.load %arg4[%c1, %c0_8] : memref<4x512xf32, #tpu.memory_space<vmem>>, vector<1x512xf32>
    %11 = vector.shape_cast %9 : vector<24x1xi1> to vector<24x1xi1>
    %12 = vector.broadcast %11 : vector<24x1xi1> to vector<24x512xi1>
    %13 = vector.shape_cast %10 : vector<1x512xf32> to vector<1x512xf32>
    %14 = vector.broadcast %13 : vector<1x512xf32> to vector<24x512xf32>
    %15 = arith.select %12, %14, %5 : vector<24x512xi1>, vector<24x512xf32>
    %cst_9 = arith.constant dense<0.000000e+00> : vector<24xf32>
    %16 = vector.multi_reduction <add>, %15, %cst_9 [1] : vector<24x512xf32> to vector<24xf32>
    %17 = vector.shape_cast %16 : vector<24xf32> to vector<24x1xf32>
    %cst_10 = arith.constant 5.120000e+02 : f32
    %18 = vector.broadcast %cst_10 : f32 to vector<24x1xf32>
    %19 = arith.divf %17, %18 : vector<24x1xf32>
    %20 = vector.broadcast %19 : vector<24x1xf32> to vector<24x512xf32>
    %21 = arith.subf %15, %20 : vector<24x512xf32>
    %22 = arith.mulf %21, %21 : vector<24x512xf32>
    %cst_11 = arith.constant dense<0.000000e+00> : vector<24xf32>
    %23 = vector.multi_reduction <add>, %22, %cst_11 [1] : vector<24x512xf32> to vector<24xf32>
    %24 = vector.shape_cast %23 : vector<24xf32> to vector<24x1xf32>
    %cst_12 = arith.constant 5.120000e+02 : f32
    %25 = vector.broadcast %cst_12 : f32 to vector<24x1xf32>
    %26 = arith.divf %24, %25 : vector<24x1xf32>
    %cst_13 = arith.constant 9.99999974E-6 : f32
    %27 = vector.broadcast %cst_13 : f32 to vector<24x1xf32>
    %28 = arith.addf %26, %27 : vector<24x1xf32>
    %29 = math.rsqrt %28 : vector<24x1xf32>
    %30 = vector.broadcast %29 : vector<24x1xf32> to vector<24x512xf32>
    %31 = arith.mulf %21, %30 : vector<24x512xf32>
    %c2 = arith.constant 2 : index
    %c0_14 = arith.constant 0 : index
    %32 = vector.load %arg4[%c2, %c0_14] : memref<4x512xf32, #tpu.memory_space<vmem>>, vector<1x512xf32>
    %33 = vector.broadcast %32 : vector<1x512xf32> to vector<24x512xf32>
    %34 = arith.mulf %31, %33 : vector<24x512xf32>
    %c3 = arith.constant 3 : index
    %c0_15 = arith.constant 0 : index
    %35 = vector.load %arg4[%c3, %c0_15] : memref<4x512xf32, #tpu.memory_space<vmem>>, vector<1x512xf32>
    %36 = vector.broadcast %35 : vector<1x512xf32> to vector<24x512xf32>
    %37 = arith.addf %34, %36 : vector<24x512xf32>
    %38 = arith.truncf %37 : vector<24x512xf32> to vector<24x512xbf16>
    %c0_16 = arith.constant 0 : index
    %c0_17 = arith.constant 0 : index
    %39 = vector.load %arg5[%c0_16, %c0_17] : memref<24x512xbf16, #tpu.memory_space<vmem>>, vector<24x512xbf16>
    tpu.vector_store %arg5[%c0_16, %c0_17], %38 {strides = array<i32>} : memref<24x512xbf16, #tpu.memory_space<vmem>>, vector<24x512xbf16>,
    return
  }
  func.func @transform_0(%arg0: i32) -> (i32, i32) {
    %c0_i32 = arith.constant 0 : i32
    %c0_i32_0 = arith.constant 0 : i32
    return %arg0, %c0_i32 : i32, i32
  }
  func.func @transform_1(%arg0: i32) -> (i32, i32) {
    %c0_i32 = arith.constant 0 : i32
    %c0_i32_0 = arith.constant 0 : i32
    return %arg0, %c0_i32 : i32, i32
  }
  func.func @transform_2(%arg0: i32) -> (i32, i32) {
    %c0_i32 = arith.constant 0 : i32
    %c0_i32_0 = arith.constant 0 : i32
    %c0_i32_1 = arith.constant 0 : i32
    return %c0_i32, %c0_i32_0 : i32, i32
  }
  func.func @transform_3(%arg0: i32) -> (i32, i32) {
    %c0_i32 = arith.constant 0 : i32
    %c0_i32_0 = arith.constant 0 : i32
    %c0_i32_1 = arith.constant 0 : i32
    return %c0_i32, %c0_i32_0 : i32, i32
  }
  func.func @transform_4(%arg0: i32) -> (i32, i32) {
    %c0_i32 = arith.constant 0 : i32
    %c0_i32_0 = arith.constant 0 : i32
    return %arg0, %c0_i32 : i32, i32
  }
}

module attributes {stable_mosaic.version = 11 : i64} {
  func.func @_head_kernel(%arg0: i32, %arg1: memref<16x768xbf16, #tpu.memory_space<vmem>>, %arg2: memref<16x128xi8, #tpu.memory_space<vmem>>, %arg3: memref<768x512xbf16, #tpu.memory_space<vmem>>, %arg4: memref<4x512xf32, #tpu.memory_space<vmem>>, %arg5: memref<16x512xbf16, #tpu.memory_space<vmem>>) attributes {dimension_semantics = [#tpu.dimension_semantics<parallel>], iteration_bounds = array<i64: 1>, scalar_prefetch = 0 : i64, scratch_operands = 0 : i64, tpu.core_type = #tpu.core_type<tc>, window_params = [{transform_indices = @transform_0, window_bounds = array<i64: 16, 768>}, {transform_indices = @transform_1, window_bounds = array<i64: 16, 128>}, {pipeline_mode = #tpu.pipeline_mode<synchronous>, transform_indices = @transform_2, window_bounds = array<i64: 768, 512>}, {pipeline_mode = #tpu.pipeline_mode<synchronous>, transform_indices = @transform_3, window_bounds = array<i64: 4, 512>}, {transform_indices = @transform_4, window_bounds = array<i64: 16, 512>}]} {
    %c0 = arith.constant 0 : index
    %c0_0 = arith.constant 0 : index
    %0 = vector.load %arg1[%c0, %c0_0] : memref<16x768xbf16, #tpu.memory_space<vmem>>, vector<16x768xbf16>
    %c0_1 = arith.constant 0 : index
    %c0_2 = arith.constant 0 : index
    %1 = vector.load %arg3[%c0_1, %c0_2] : memref<768x512xbf16, #tpu.memory_space<vmem>>, vector<768x512xbf16>
    %cst = arith.constant dense<0.000000e+00> : vector<16x512xf32>
    %2 = tpu.matmul %0, %1, %cst {dimension_numbers = #tpu.dot_dimension_numbers<[1], [0], [0], [1], [0, 0, 1, 1], [], []>} : vector<16x768xbf16>, vector<768x512xbf16>, vector<16x512xf32> -> vector<16x512xf32>
    %c0_3 = arith.constant 0 : index
    %c0_4 = arith.constant 0 : index
    %3 = vector.load %arg4[%c0_3, %c0_4] : memref<4x512xf32, #tpu.memory_space<vmem>>, vector<1x512xf32>
    %4 = vector.broadcast %3 : vector<1x512xf32> to vector<16x512xf32>
    %5 = arith.addf %2, %4 : vector<16x512xf32>
    %c0_5 = arith.constant 0 : index
    %c0_6 = arith.constant 0 : index
    %6 = vector.load %arg2[%c0_5, %c0_6] : memref<16x128xi8, #tpu.memory_space<vmem>>, vector<16x1xi8>
    %7 = arith.sitofp %6 : vector<16x1xi8> to vector<16x1xf32>
    %cst_7 = arith.constant 0.000000e+00 : f32
    %8 = vector.broadcast %cst_7 : f32 to vector<16x1xf32>
    %9 = arith.cmpf one, %7, %8 : vector<16x1xf32>
    %c1 = arith.constant 1 : index
    %c0_8 = arith.constant 0 : index
    %10 = vector.load %arg4[%c1, %c0_8] : memref<4x512xf32, #tpu.memory_space<vmem>>, vector<1x512xf32>
    %11 = vector.shape_cast %9 : vector<16x1xi1> to vector<16x1xi1>
    %12 = vector.broadcast %11 : vector<16x1xi1> to vector<16x512xi1>
    %13 = vector.shape_cast %10 : vector<1x512xf32> to vector<1x512xf32>
    %14 = vector.broadcast %13 : vector<1x512xf32> to vector<16x512xf32>
    %15 = arith.select %12, %14, %5 : vector<16x512xi1>, vector<16x512xf32>
    %cst_9 = arith.constant dense<0.000000e+00> : vector<16xf32>
    %16 = vector.multi_reduction <add>, %15, %cst_9 [1] : vector<16x512xf32> to vector<16xf32>
    %17 = vector.shape_cast %16 : vector<16xf32> to vector<16x1xf32>
    %cst_10 = arith.constant 5.120000e+02 : f32
    %18 = vector.broadcast %cst_10 : f32 to vector<16x1xf32>
    %19 = arith.divf %17, %18 : vector<16x1xf32>
    %20 = vector.broadcast %19 : vector<16x1xf32> to vector<16x512xf32>
    %21 = arith.subf %15, %20 : vector<16x512xf32>
    %22 = arith.mulf %21, %21 : vector<16x512xf32>
    %cst_11 = arith.constant dense<0.000000e+00> : vector<16xf32>
    %23 = vector.multi_reduction <add>, %22, %cst_11 [1] : vector<16x512xf32> to vector<16xf32>
    %24 = vector.shape_cast %23 : vector<16xf32> to vector<16x1xf32>
    %cst_12 = arith.constant 5.120000e+02 : f32
    %25 = vector.broadcast %cst_12 : f32 to vector<16x1xf32>
    %26 = arith.divf %24, %25 : vector<16x1xf32>
    %cst_13 = arith.constant 9.99999974E-6 : f32
    %27 = vector.broadcast %cst_13 : f32 to vector<16x1xf32>
    %28 = arith.addf %26, %27 : vector<16x1xf32>
    %29 = math.rsqrt %28 : vector<16x1xf32>
    %30 = vector.broadcast %29 : vector<16x1xf32> to vector<16x512xf32>
    %31 = arith.mulf %21, %30 : vector<16x512xf32>
    %c2 = arith.constant 2 : index
    %c0_14 = arith.constant 0 : index
    %32 = vector.load %arg4[%c2, %c0_14] : memref<4x512xf32, #tpu.memory_space<vmem>>, vector<1x512xf32>
    %33 = vector.broadcast %32 : vector<1x512xf32> to vector<16x512xf32>
    %34 = arith.mulf %31, %33 : vector<16x512xf32>
    %c3 = arith.constant 3 : index
    %c0_15 = arith.constant 0 : index
    %35 = vector.load %arg4[%c3, %c0_15] : memref<4x512xf32, #tpu.memory_space<vmem>>, vector<1x512xf32>
    %36 = vector.broadcast %35 : vector<1x512xf32> to vector<16x512xf32>
    %37 = arith.addf %34, %36 : vector<16x512xf32>
    %38 = arith.truncf %37 : vector<16x512xf32> to vector<16x512xbf16>
    %c0_16 = arith.constant 0 : index
    %c0_17 = arith.constant 0 : index
    %39 = vector.load %arg5[%c0_16, %c0_17] : memref<16x512xbf16, #tpu.memory_space<vmem>>, vector<16x512xbf16>
    tpu.vector_store %arg5[%c0_16, %c0_17], %38 {strides = array<i32>} : memref<16x512xbf16, #tpu.memory_space<vmem>>, vector<16x512xbf16>,
    return
  }
  func.func @transform_0(%arg0: i32) -> (i32, i32) {
    %c0_i32 = arith.constant 0 : i32
    %c0_i32_0 = arith.constant 0 : i32
    return %arg0, %c0_i32 : i32, i32
  }
  func.func @transform_1(%arg0: i32) -> (i32, i32) {
    %c0_i32 = arith.constant 0 : i32
    %c0_i32_0 = arith.constant 0 : i32
    return %arg0, %c0_i32 : i32, i32
  }
  func.func @transform_2(%arg0: i32) -> (i32, i32) {
    %c0_i32 = arith.constant 0 : i32
    %c0_i32_0 = arith.constant 0 : i32
    %c0_i32_1 = arith.constant 0 : i32
    return %c0_i32, %c0_i32_0 : i32, i32
  }
  func.func @transform_3(%arg0: i32) -> (i32, i32) {
    %c0_i32 = arith.constant 0 : i32
    %c0_i32_0 = arith.constant 0 : i32
    %c0_i32_1 = arith.constant 0 : i32
    return %c0_i32, %c0_i32_0 : i32, i32
  }
  func.func @transform_4(%arg0: i32) -> (i32, i32) {
    %c0_i32 = arith.constant 0 : i32
    %c0_i32_0 = arith.constant 0 : i32
    return %arg0, %c0_i32 : i32, i32
  }
}

</mosaic_0001>

<llo_original>
// kernel: multimodal_encoder_head.3
$region0: #{multimodal_encoder_head.3}
  #allocation0 [shape = 'u32[]', space=smem, size = 0x4, offset = 0x4, fixed_abs, tag = 'smem constant byte address 0x4 - core index']
  #allocation1 [shape = 'u32[144,128]{1,0:T(1,128)}', space=vmem, size = 0x12000, scoped, tag = 'internal scratch']
  %s0 = inlined_call_operand.vmem [shape: bf16[24,768], index: 0, kind: input, shape index: {}]
  %s1 = inlined_call_operand.vmem [shape: s8[24,128], index: 1, kind: input, shape index: {}]
  %s2 = inlined_call_operand.vmem [shape: bf16[768,512], index: 2, kind: input, shape index: {}]
  %s3 = inlined_call_operand.vmem [shape: f32[4,512], index: 3, kind: input, shape index: {}]
  %s4 = inlined_call_operand.vmem [shape: bf16[24,512], index: 4, kind: output, shape index: {}]
  %s5 = sld [smem:[#allocation0]]
  $region26: #{multimodal_encoder_head.3} parent=0
    _
  %s7 = ssub.s32 1, %s5
  %s8 = scalar_select 0, %s7, %s5
  // Predicated region
  $region2: #{multimodal_encoder_head.3} parent=0 // pred_check
    _
  $region3: #{multimodal_encoder_head.3} parent=0 // pred_check_branch
    %10 = sbr.rel (0) target = $region5
  $region4: #{multimodal_encoder_head.3} parent=0 // pred_region
    _
  $region5: #{multimodal_encoder_head.3} parent=0 // pred_fallthru
    _
  // Predicated region
  $region6: #{multimodal_encoder_head.3} parent=0 // pred_check
    _
  $region7: #{multimodal_encoder_head.3} parent=0 // pred_check_branch
    %12 = sbr.rel (0) target = $region9
  $region8: #{multimodal_encoder_head.3} parent=0 // pred_region
    _
  $region9: #{multimodal_encoder_head.3} parent=0 // pred_fallthru
    _
  // Predicated region
  $region10: #{multimodal_encoder_head.3} parent=0 // pred_check
    _
  $region11: #{multimodal_encoder_head.3} parent=0 // pred_check_branch
    %14 = sbr.rel (0) target = $region13
  $region12: #{multimodal_encoder_head.3} parent=0 // pred_region
    _
  $region13: #{multimodal_encoder_head.3} parent=0 // pred_fallthru
    _
  // Predicated region
  $region14: #{multimodal_encoder_head.3} parent=0 // pred_check
    _
  $region15: #{multimodal_encoder_head.3} parent=0 // pred_check_branch
    %16 = sbr.rel (0) target = $region17
  $region16: #{multimodal_encoder_head.3} parent=0 // pred_region
    _
  $region17: #{multimodal_encoder_head.3} parent=0 // pred_fallthru
    _
  %v17 = vld [vmem:[%s0] sm:$0xff]
  %v18 = vld [vmem:[%s0 + $0x8] sm:$0xff]
  %v19 = vld [vmem:[%s0 + $0x10] sm:$0xff]
  %v20 = vld [vmem:[%s0 + $0x18] sm:$0xff]
  %v21 = vld [vmem:[%s0 + $0x20] sm:$0xff]
  %v22 = vld [vmem:[%s0 + $0x28] sm:$0xff]
  %v23 = vld [vmem:[%s0 + $0x30] sm:$0xff]
  %v24 = vld [vmem:[%s0 + $0x38] sm:$0xff]
  %v25 = vld [vmem:[%s0 + $0x40] sm:$0xff]
  %v26 = vld [vmem:[%s2] sm:$0xff]
  %v27 = vld [vmem:[%s2 + $0x8] sm:$0xff]
  %v28 = vld [vmem:[%s2 + $0x10] sm:$0xff]
  %v29 = vld [vmem:[%s2 + $0x18] sm:$0xff]
  %v30 = vld [vmem:[%s2 + $0x20] sm:$0xff]
  %v31 = vld [vmem:[%s2 + $0x28] sm:$0xff]
  %v32 = vld [vmem:[%s2 + $0x30] sm:$0xff]
  %v33 = vld [vmem:[%s2 + $0x38] sm:$0xff]
  %v34 = vld [vmem:[%s2 + $0x40] sm:$0xff]
  %v35 = vld [vmem:[%s2 + $0x48] sm:$0xff]
  %v36 = vld [vmem:[%s2 + $0x50] sm:$0xff]
  %v37 = vld [vmem:[%s2 + $0x58] sm:$0xff]
  %v38 = vld [vmem:[%s2 + $0x60] sm:$0xff]
  %v39 = vld [vmem:[%s2 + $0x68] sm:$0xff]
  %v40 = vld [vmem:[%s2 + $0x70] sm:$0xff]
  %v41 = vld [vmem:[%s2 + $0x78] sm:$0xff]
  %v42 = vld [vmem:[%s2 + $0x80] sm:$0xff]
  %v43 = vld [vmem:[%s2 + $0x88] sm:$0xff]
  %v44 = vld [vmem:[%s2 + $0x90] sm:$0xff]
  %v45 = vld [vmem:[%s2 + $0x98] sm:$0xff]
  %v46 = vld [vmem:[%s2 + $0xa0] sm:$0xff]
  %v47 = vld [vmem:[%s2 + $0xa8] sm:$0xff]
  %v48 = vld [vmem:[%s2 + $0xb0] sm:$0xff]
  %v49 = vld [vmem:[%s2 + $0xb8] sm:$0xff]
  %v50 = vld [vmem:[%s2 + $0xc0] sm:$0xff]
  %v51 = vld [vmem:[%s2 + $0xc8] sm:$0xff]
  %v52 = vld [vmem:[%s2 + $0xd0] sm:$0xff]
  %v53 = vld [vmem:[%s2 + $0xd8] sm:$0xff]
  %v54 = vld [vmem:[%s2 + $0xe0] sm:$0xff]
  %v55 = vld [vmem:[%s2 + $0xe8] sm:$0xff]
  %v56 = vld [vmem:[%s2 + $0xf0] sm:$0xff]
  %v57 = vld [vmem:[%s2 + $0xf8] sm:$0xff]
  %v58 = vld [vmem:[%s2 + $0x100] sm:$0xff]
  %v59 = vld [vmem:[%s2 + $0x108] sm:$0xff]
  %v60 = vld [vmem:[%s2 + $0x110] sm:$0xff]
  %v61 = vld [vmem:[%s2 + $0x118] sm:$0xff]
  %v62 = vld [vmem:[%s2 + $0x120] sm:$0xff]
  %v63 = vld [vmem:[%s2 + $0x128] sm:$0xff]
  %v64 = vld [vmem:[%s2 + $0x130] sm:$0xff]
  %v65 = vld [vmem:[%s2 + $0x138] sm:$0xff]
  %v66 = vld [vmem:[%s2 + $0x140] sm:$0xff]
  %v67 = vld [vmem:[%s2 + $0x148] sm:$0xff]
  %v68 = vld [vmem:[%s2 + $0x150] sm:$0xff]
  %v69 = vld [vmem:[%s2 + $0x158] sm:$0xff]
  %v70 = vld [vmem:[%s2 + $0x160] sm:$0xff]
  %v71 = vld [vmem:[%s2 + $0x168] sm:$0xff]
  %v72 = vld [vmem:[%s2 + $0x170] sm:$0xff]
  %v73 = vld [vmem:[%s2 + $0x178] sm:$0xff]
  %v74 = vld [vmem:[%s2 + $0x180] sm:$0xff]
  %v75 = vld [vmem:[%s2 + $0x188] sm:$0xff]
  %v76 = vld [vmem:[%s2 + $0x190] sm:$0xff]
  %v77 = vld [vmem:[%s2 + $0x198] sm:$0xff]
  %v78 = vld [vmem:[%s2 + $0x1a0] sm:$0xff]
  %v79 = vld [vmem:[%s2 + $0x1a8] sm:$0xff]
  %v80 = vld [vmem:[%s2 + $0x1b0] sm:$0xff]
  %v81 = vld [vmem:[%s2 + $0x1b8] sm:$0xff]
  %v82 = vld [vmem:[%s2 + $0x1c0] sm:$0xff]
  %v83 = vld [vmem:[%s2 + $0x1c8] sm:$0xff]
  %v84 = vld [vmem:[%s2 + $0x1d0] sm:$0xff]
  %v85 = vld [vmem:[%s2 + $0x1d8] sm:$0xff]
  %v86 = vld [vmem:[%s2 + $0x1e0] sm:$0xff]
  %v87 = vld [vmem:[%s2 + $0x1e8] sm:$0xff]
  %v88 = vld [vmem:[%s2 + $0x1f0] sm:$0xff]
  %v89 = vld [vmem:[%s2 + $0x1f8] sm:$0xff]
  %v90 = vld [vmem:[%s2 + $0x200] sm:$0xff]
  %v91 = vld [vmem:[%s2 + $0x208] sm:$0xff]
  %v92 = vld [vmem:[%s2 + $0x210] sm:$0xff]
  %v93 = vld [vmem:[%s2 + $0x218] sm:$0xff]
  %v94 = vld [vmem:[%s2 + $0x220] sm:$0xff]
  %v95 = vld [vmem:[%s2 + $0x228] sm:$0xff]
  %v96 = vld [vmem:[%s2 + $0x230] sm:$0xff]
  %v97 = vld [vmem:[%s2 + $0x238] sm:$0xff]
  %v98 = vld [vmem:[%s2 + $0x240] sm:$0xff]
  %v99 = vld [vmem:[%s2 + $0x248] sm:$0xff]
  %v100 = vld [vmem:[%s2 + $0x250] sm:$0xff]
  %v101 = vld [vmem:[%s2 + $0x258] sm:$0xff]
  %v102 = vld [vmem:[%s2 + $0x260] sm:$0xff]
  %v103 = vld [vmem:[%s2 + $0x268] sm:$0xff]
  %v104 = vld [vmem:[%s2 + $0x270] sm:$0xff]
  %v105 = vld [vmem:[%s2 + $0x278] sm:$0xff]
  %v106 = vld [vmem:[%s2 + $0x280] sm:$0xff]
  %v107 = vld [vmem:[%s2 + $0x288] sm:$0xff]
  %v108 = vld [vmem:[%s2 + $0x290] sm:$0xff]
  %v109 = vld [vmem:[%s2 + $0x298] sm:$0xff]
  %v110 = vld [vmem:[%s2 + $0x2a0] sm:$0xff]
  %v111 = vld [vmem:[%s2 + $0x2a8] sm:$0xff]
  %v112 = vld [vmem:[%s2 + $0x2b0] sm:$0xff]
  %v113 = vld [vmem:[%s2 + $0x2b8] sm:$0xff]
  %v114 = vld [vmem:[%s2 + $0x2c0] sm:$0xff]
  %v115 = vld [vmem:[%s2 + $0x2c8] sm:$0xff]
  %v116 = vld [vmem:[%s2 + $0x2d0] sm:$0xff]
  %v117 = vld [vmem:[%s2 + $0x2d8] sm:$0xff]
  %v118 = vld [vmem:[%s2 + $0x2e0] sm:$0xff]
  %v119 = vld [vmem:[%s2 + $0x2e8] sm:$0xff]
  %v120 = vld [vmem:[%s2 + $0x2f0] sm:$0xff]
  %v121 = vld [vmem:[%s2 + $0x2f8] sm:$0xff]
  %v122 = vld [vmem:[%s2 + $0x300] sm:$0xff]
  %v123 = vld [vmem:[%s2 + $0x308] sm:$0xff]
  %v124 = vld [vmem:[%s2 + $0x310] sm:$0xff]
  %v125 = vld [vmem:[%s2 + $0x318] sm:$0xff]
  %v126 = vld [vmem:[%s2 + $0x320] sm:$0xff]
  %v127 = vld [vmem:[%s2 + $0x328] sm:$0xff]
  %v128 = vld [vmem:[%s2 + $0x330] sm:$0xff]
  %v129 = vld [vmem:[%s2 + $0x338] sm:$0xff]
  %v130 = vld [vmem:[%s2 + $0x340] sm:$0xff]
  %v131 = vld [vmem:[%s2 + $0x348] sm:$0xff]
  %v132 = vld [vmem:[%s2 + $0x350] sm:$0xff]
  %v133 = vld [vmem:[%s2 + $0x358] sm:$0xff]
  %v134 = vld [vmem:[%s2 + $0x360] sm:$0xff]
  %v135 = vld [vmem:[%s2 + $0x368] sm:$0xff]
  %v136 = vld [vmem:[%s2 + $0x370] sm:$0xff]
  %v137 = vld [vmem:[%s2 + $0x378] sm:$0xff]
  %v138 = vld [vmem:[%s2 + $0x380] sm:$0xff]
  %v139 = vld [vmem:[%s2 + $0x388] sm:$0xff]
  %v140 = vld [vmem:[%s2 + $0x390] sm:$0xff]
  %v141 = vld [vmem:[%s2 + $0x398] sm:$0xff]
  %v142 = vld [vmem:[%s2 + $0x3a0] sm:$0xff]
  %v143 = vld [vmem:[%s2 + $0x3a8] sm:$0xff]
  %v144 = vld [vmem:[%s2 + $0x3b0] sm:$0xff]
  %v145 = vld [vmem:[%s2 + $0x3b8] sm:$0xff]
  %v146 = vld [vmem:[%s2 + $0x3c0] sm:$0xff]
  %v147 = vld [vmem:[%s2 + $0x3c8] sm:$0xff]
  %v148 = vld [vmem:[%s2 + $0x3d0] sm:$0xff]
  %v149 = vld [vmem:[%s2 + $0x3d8] sm:$0xff]
  %v150 = vld [vmem:[%s2 + $0x3e0] sm:$0xff]
  %v151 = vld [vmem:[%s2 + $0x3e8] sm:$0xff]
  %v152 = vld [vmem:[%s2 + $0x3f0] sm:$0xff]
  %v153 = vld [vmem:[%s2 + $0x3f8] sm:$0xff]
  %v154 = vld [vmem:[%s2 + $0x400] sm:$0xff]
  %v155 = vld [vmem:[%s2 + $0x408] sm:$0xff]
  %v156 = vld [vmem:[%s2 + $0x410] sm:$0xff]
  %v157 = vld [vmem:[%s2 + $0x418] sm:$0xff]
  %v158 = vld [vmem:[%s2 + $0x420] sm:$0xff]
  %v159 = vld [vmem:[%s2 + $0x428] sm:$0xff]
  %v160 = vld [vmem:[%s2 + $0x430] sm:$0xff]
  %v161 = vld [vmem:[%s2 + $0x438] sm:$0xff]
  %v162 = vld [vmem:[%s2 + $0x440] sm:$0xff]
  %v163 = vld [vmem:[%s2 + $0x448] sm:$0xff]
  %v164 = vld [vmem:[%s2 + $0x450] sm:$0xff]
  %v165 = vld [vmem:[%s2 + $0x458] sm:$0xff]
  %v166 = vld [vmem:[%s2 + $0x460] sm:$0xff]
  %v167 = vld [vmem:[%s2 + $0x468] sm:$0xff]
  %v168 = vld [vmem:[%s2 + $0x470] sm:$0xff]
  %v169 = vld [vmem:[%s2 + $0x478] sm:$0xff]
  %v170 = vld [vmem:[%s2 + $0x480] sm:$0xff]
  %v171 = vld [vmem:[%s2 + $0x488] sm:$0xff]
  %v172 = vld [vmem:[%s2 + $0x490] sm:$0xff]
  %v173 = vld [vmem:[%s2 + $0x498] sm:$0xff]
  %v174 = vld [vmem:[%s2 + $0x4a0] sm:$0xff]
  %v175 = vld [vmem:[%s2 + $0x4a8] sm:$0xff]
  %v176 = vld [vmem:[%s2 + $0x4b0] sm:$0xff]
  %v177 = vld [vmem:[%s2 + $0x4b8] sm:$0xff]
  %v178 = vld [vmem:[%s2 + $0x4c0] sm:$0xff]
  %v179 = vld [vmem:[%s2 + $0x4c8] sm:$0xff]
  %v180 = vld [vmem:[%s2 + $0x4d0] sm:$0xff]
  %v181 = vld [vmem:[%s2 + $0x4d8] sm:$0xff]
  %v182 = vld [vmem:[%s2 + $0x4e0] sm:$0xff]
  %v183 = vld [vmem:[%s2 + $0x4e8] sm:$0xff]
  %v184 = vld [vmem:[%s2 + $0x4f0] sm:$0xff]
  %v185 = vld [vmem:[%s2 + $0x4f8] sm:$0xff]
  %v186 = vld [vmem:[%s2 + $0x500] sm:$0xff]
  %v187 = vld [vmem:[%s2 + $0x508] sm:$0xff]
  %v188 = vld [vmem:[%s2 + $0x510] sm:$0xff]
  %v189 = vld [vmem:[%s2 + $0x518] sm:$0xff]
  %v190 = vld [vmem:[%s2 + $0x520] sm:$0xff]
  %v191 = vld [vmem:[%s2 + $0x528] sm:$0xff]
  %v192 = vld [vmem:[%s2 + $0x530] sm:$0xff]
  %v193 = vld [vmem:[%s2 + $0x538] sm:$0xff]
  %v194 = vld [vmem:[%s2 + $0x540] sm:$0xff]
  %v195 = vld [vmem:[%s2 + $0x548] sm:$0xff]
  %v196 = vld [vmem:[%s2 + $0x550] sm:$0xff]
  %v197 = vld [vmem:[%s2 + $0x558] sm:$0xff]
  %v198 = vld [vmem:[%s2 + $0x560] sm:$0xff]
  %v199 = vld [vmem:[%s2 + $0x568] sm:$0xff]
  %v200 = vld [vmem:[%s2 + $0x570] sm:$0xff]
  %v201 = vld [vmem:[%s2 + $0x578] sm:$0xff]
  %v202 = vld [vmem:[%s2 + $0x580] sm:$0xff]
  %v203 = vld [vmem:[%s2 + $0x588] sm:$0xff]
  %v204 = vld [vmem:[%s2 + $0x590] sm:$0xff]
  %v205 = vld [vmem:[%s2 + $0x598] sm:$0xff]
  %v206 = vld [vmem:[%s2 + $0x5a0] sm:$0xff]
  %v207 = vld [vmem:[%s2 + $0x5a8] sm:$0xff]
  %v208 = vld [vmem:[%s2 + $0x5b0] sm:$0xff]
  %v209 = vld [vmem:[%s2 + $0x5b8] sm:$0xff]
  %v210 = vld [vmem:[%s2 + $0x5c0] sm:$0xff]
  %v211 = vld [vmem:[%s2 + $0x5c8] sm:$0xff]
  %v212 = vld [vmem:[%s2 + $0x5d0] sm:$0xff]
  %v213 = vld [vmem:[%s2 + $0x5d8] sm:$0xff]
  %v214 = vld [vmem:[%s2 + $0x5e0] sm:$0xff]
  %v215 = vld [vmem:[%s2 + $0x5e8] sm:$0xff]
  %v216 = vld [vmem:[%s2 + $0x5f0] sm:$0xff]
  %v217 = vld [vmem:[%s2 + $0x5f8] sm:$0xff]
  %v218 = vld [vmem:[%s3] ss:$4 sm:$0xf]
  %v220 = vlaneseq
  %v221 = vshrl.u32 %v220, 7
  %v222 = vsub.s32 0, %v221
  %v223 = vrot.slane %v218, %v222
  %v224 = vlaneseq
  %v225 = vshrl.u32 %v224, 7
  %v226 = vsub.s32 1, %v225
  %v227 = vrot.slane %v218, %v226
  %v228 = vlaneseq
  %v229 = vshrl.u32 %v228, 7
  %v230 = vsub.s32 2, %v229
  %v231 = vrot.slane %v218, %v230
  %v232 = vlaneseq
  %v233 = vshrl.u32 %v232, 7
  %v234 = vsub.s32 3, %v233
  %v235 = vrot.slane %v218, %v234
  %v249 = vunpack.c.l.b16 %v17
  %v250 = vunpack.c.h.b16 %v17
  %v251 = vunpack.c.l.b16 %v18
  %v252 = vunpack.c.h.b16 %v18
  %v253 = vunpack.c.l.b16 %v19
  %v254 = vunpack.c.h.b16 %v19
  %v255 = vunpack.c.l.b16 %v20
  %v256 = vunpack.c.h.b16 %v20
  %v257 = vunpack.c.l.b16 %v21
  %v258 = vunpack.c.h.b16 %v21
  %v259 = vunpack.c.l.b16 %v22
  %v260 = vunpack.c.h.b16 %v22
  %v261 = vunpack.c.l.b16 %v23
  %v262 = vunpack.c.h.b16 %v23
  %v263 = vunpack.c.l.b16 %v24
  %v264 = vunpack.c.h.b16 %v24
  %v265 = vunpack.c.l.b16 %v25
  %v266 = vunpack.c.h.b16 %v25
  %v267 = vpack.c.b16 %v255, %v249
  %v268 = vpack.c.b16 %v256, %v250
  %v269 = vpack.c.b16 %v257, %v251
  %v270 = vpack.c.b16 %v258, %v252
  %v271 = vpack.c.b16 %v259, %v253
  %v272 = vpack.c.b16 %v260, %v254
  %v273 = vpack.c.b16 %v261, %v261
  %v274 = vpack.c.b16 %v262, %v262
  %v275 = vpack.c.b16 %v263, %v263
  %v276 = vpack.c.b16 %v264, %v264
  %v277 = vpack.c.b16 %v265, %v265
  %v278 = vpack.c.b16 %v266, %v266
  %v483 = vunpack.c.l.b16 %v26
  %v484 = vunpack.c.h.b16 %v26
  %v485 = vunpack.c.l.b16 %v27
  %v486 = vunpack.c.h.b16 %v27
  %v487 = vunpack.c.l.b16 %v28
  %v488 = vunpack.c.h.b16 %v28
  %v489 = vunpack.c.l.b16 %v29
  %v490 = vunpack.c.h.b16 %v29
  %v491 = vunpack.c.l.b16 %v30
  %v492 = vunpack.c.h.b16 %v30
  %v493 = vunpack.c.l.b16 %v31
  %v494 = vunpack.c.h.b16 %v31
  %v495 = vunpack.c.l.b16 %v32
  %v496 = vunpack.c.h.b16 %v32
  %v497 = vunpack.c.l.b16 %v33
  %v498 = vunpack.c.h.b16 %v33
  %v499 = vunpack.c.l.b16 %v34
  %v500 = vunpack.c.h.b16 %v34
  %v501 = vunpack.c.l.b16 %v35
  %v502 = vunpack.c.h.b16 %v35
  %v503 = vunpack.c.l.b16 %v36
  %v504 = vunpack.c.h.b16 %v36
  %v505 = vunpack.c.l.b16 %v37
  %v506 = vunpack.c.h.b16 %v37
  %v507 = vunpack.c.l.b16 %v38
  %v508 = vunpack.c.h.b16 %v38
  %v509 = vunpack.c.l.b16 %v39
  %v510 = vunpack.c.h.b16 %v39
  %v511 = vunpack.c.l.b16 %v40
  %v512 = vunpack.c.h.b16 %v40
  %v513 = vunpack.c.l.b16 %v41
  %v514 = vunpack.c.h.b16 %v41
  %v515 = vunpack.c.l.b16 %v42
  %v516 = vunpack.c.h.b16 %v42
  %v517 = vunpack.c.l.b16 %v43
  %v518 = vunpack.c.h.b16 %v43
  %v519 = vunpack.c.l.b16 %v44
  %v520 = vunpack.c.h.b16 %v44
  %v521 = vunpack.c.l.b16 %v45
  %v522 = vunpack.c.h.b16 %v45
  %v523 = vunpack.c.l.b16 %v46
  %v524 = vunpack.c.h.b16 %v46
  %v525 = vunpack.c.l.b16 %v47
  %v526 = vunpack.c.h.b16 %v47
  %v527 = vunpack.c.l.b16 %v48
  %v528 = vunpack.c.h.b16 %v48
  %v529 = vunpack.c.l.b16 %v49
  %v530 = vunpack.c.h.b16 %v49
  %v531 = vunpack.c.l.b16 %v50
  %v532 = vunpack.c.h.b16 %v50
  %v533 = vunpack.c.l.b16 %v51
  %v534 = vunpack.c.h.b16 %v51
  %v535 = vunpack.c.l.b16 %v52
  %v536 = vunpack.c.h.b16 %v52
  %v537 = vunpack.c.l.b16 %v53
  %v538 = vunpack.c.h.b16 %v53
  %v539 = vunpack.c.l.b16 %v54
  %v540 = vunpack.c.h.b16 %v54
  %v541 = vunpack.c.l.b16 %v55
  %v542 = vunpack.c.h.b16 %v55
  %v543 = vunpack.c.l.b16 %v56
  %v544 = vunpack.c.h.b16 %v56
  %v545 = vunpack.c.l.b16 %v57
  %v546 = vunpack.c.h.b16 %v57
  %v547 = vunpack.c.l.b16 %v58
  %v548 = vunpack.c.h.b16 %v58
  %v549 = vunpack.c.l.b16 %v59
  %v550 = vunpack.c.h.b16 %v59
  %v551 = vunpack.c.l.b16 %v60
  %v552 = vunpack.c.h.b16 %v60
  %v553 = vunpack.c.l.b16 %v61
  %v554 = vunpack.c.h.b16 %v61
  %v555 = vunpack.c.l.b16 %v62
  %v556 = vunpack.c.h.b16 %v62
  %v557 = vunpack.c.l.b16 %v63
  %v558 = vunpack.c.h.b16 %v63
  %v559 = vunpack.c.l.b16 %v64
  %v560 = vunpack.c.h.b16 %v64
  %v561 = vunpack.c.l.b16 %v65
  %v562 = vunpack.c.h.b16 %v65
  %v563 = vunpack.c.l.b16 %v66
  %v564 = vunpack.c.h.b16 %v66
  %v565 = vunpack.c.l.b16 %v67
  %v566 = vunpack.c.h.b16 %v67
  %v567 = vunpack.c.l.b16 %v68
  %v568 = vunpack.c.h.b16 %v68
  %v569 = vunpack.c.l.b16 %v69
  %v570 = vunpack.c.h.b16 %v69
  %v571 = vunpack.c.l.b16 %v70
  %v572 = vunpack.c.h.b16 %v70
  %v573 = vunpack.c.l.b16 %v71
  %v574 = vunpack.c.h.b16 %v71
  %v575 = vunpack.c.l.b16 %v72
  %v576 = vunpack.c.h.b16 %v72
  %v577 = vunpack.c.l.b16 %v73
  %v578 = vunpack.c.h.b16 %v73
  %v579 = vunpack.c.l.b16 %v74
  %v580 = vunpack.c.h.b16 %v74
  %v581 = vunpack.c.l.b16 %v75
  %v582 = vunpack.c.h.b16 %v75
  %v583 = vunpack.c.l.b16 %v76
  %v584 = vunpack.c.h.b16 %v76
  %v585 = vunpack.c.l.b16 %v77
  %v586 = vunpack.c.h.b16 %v77
  %v587 = vunpack.c.l.b16 %v78
  %v588 = vunpack.c.h.b16 %v78
  %v589 = vunpack.c.l.b16 %v79
  %v590 = vunpack.c.h.b16 %v79
  %v591 = vunpack.c.l.b16 %v80
  %v592 = vunpack.c.h.b16 %v80
  %v593 = vunpack.c.l.b16 %v81
  %v594 = vunpack.c.h.b16 %v81
  %v595 = vunpack.c.l.b16 %v82
  %v596 = vunpack.c.h.b16 %v82
  %v597 = vunpack.c.l.b16 %v83
  %v598 = vunpack.c.h.b16 %v83
  %v599 = vunpack.c.l.b16 %v84
  %v600 = vunpack.c.h.b16 %v84
  %v601 = vunpack.c.l.b16 %v85
  %v602 = vunpack.c.h.b16 %v85
  %v603 = vunpack.c.l.b16 %v86
  %v604 = vunpack.c.h.b16 %v86
  %v605 = vunpack.c.l.b16 %v87
  %v606 = vunpack.c.h.b16 %v87
  %v607 = vunpack.c.l.b16 %v88
  %v608 = vunpack.c.h.b16 %v88
  %v609 = vunpack.c.l.b16 %v89
  %v610 = vunpack.c.h.b16 %v89
  %v611 = vunpack.c.l.b16 %v90
  %v612 = vunpack.c.h.b16 %v90
  %v613 = vunpack.c.l.b16 %v91
  %v614 = vunpack.c.h.b16 %v91
  %v615 = vunpack.c.l.b16 %v92
  %v616 = vunpack.c.h.b16 %v92
  %v617 = vunpack.c.l.b16 %v93
  %v618 = vunpack.c.h.b16 %v93
  %v619 = vunpack.c.l.b16 %v94
  %v620 = vunpack.c.h.b16 %v94
  %v621 = vunpack.c.l.b16 %v95
  %v622 = vunpack.c.h.b16 %v95
  %v623 = vunpack.c.l.b16 %v96
  %v624 = vunpack.c.h.b16 %v96
  %v625 = vunpack.c.l.b16 %v97
  %v626 = vunpack.c.h.b16 %v97
  %v627 = vunpack.c.l.b16 %v98
  %v628 = vunpack.c.h.b16 %v98
  %v629 = vunpack.c.l.b16 %v99
  %v630 = vunpack.c.h.b16 %v99
  %v631 = vunpack.c.l.b16 %v100
  %v632 = vunpack.c.h.b16 %v100
  %v633 = vunpack.c.l.b16 %v101
  %v634 = vunpack.c.h.b16 %v101
  %v635 = vunpack.c.l.b16 %v102
  %v636 = vunpack.c.h.b16 %v102
  %v637 = vunpack.c.l.b16 %v103
  %v638 = vunpack.c.h.b16 %v103
  %v639 = vunpack.c.l.b16 %v104
  %v640 = vunpack.c.h.b16 %v104
  %v641 = vunpack.c.l.b16 %v105
  %v642 = vunpack.c.h.b16 %v105
  %v643 = vunpack.c.l.b16 %v106
  %v644 = vunpack.c.h.b16 %v106
  %v645 = vunpack.c.l.b16 %v107
  %v646 = vunpack.c.h.b16 %v107
  %v647 = vunpack.c.l.b16 %v108
  %v648 = vunpack.c.h.b16 %v108
  %v649 = vunpack.c.l.b16 %v109
  %v650 = vunpack.c.h.b16 %v109
  %v651 = vunpack.c.l.b16 %v110
  %v652 = vunpack.c.h.b16 %v110
  %v653 = vunpack.c.l.b16 %v111
  %v654 = vunpack.c.h.b16 %v111
  %v655 = vunpack.c.l.b16 %v112
  %v656 = vunpack.c.h.b16 %v112
  %v657 = vunpack.c.l.b16 %v113
  %v658 = vunpack.c.h.b16 %v113
  %v659 = vunpack.c.l.b16 %v114
  %v660 = vunpack.c.h.b16 %v114
  %v661 = vunpack.c.l.b16 %v115
  %v662 = vunpack.c.h.b16 %v115
  %v663 = vunpack.c.l.b16 %v116
  %v664 = vunpack.c.h.b16 %v116
  %v665 = vunpack.c.l.b16 %v117
  %v666 = vunpack.c.h.b16 %v117
  %v667 = vunpack.c.l.b16 %v118
  %v668 = vunpack.c.h.b16 %v118
  %v669 = vunpack.c.l.b16 %v119
  %v670 = vunpack.c.h.b16 %v119
  %v671 = vunpack.c.l.b16 %v120
  %v672 = vunpack.c.h.b16 %v120
  %v673 = vunpack.c.l.b16 %v121
  %v674 = vunpack.c.h.b16 %v121
  %v675 = vunpack.c.l.b16 %v122
  %v676 = vunpack.c.h.b16 %v122
  %v677 = vunpack.c.l.b16 %v123
  %v678 = vunpack.c.h.b16 %v123
  %v679 = vunpack.c.l.b16 %v124
  %v680 = vunpack.c.h.b16 %v124
  %v681 = vunpack.c.l.b16 %v125
  %v682 = vunpack.c.h.b16 %v125
  %v683 = vunpack.c.l.b16 %v126
  %v684 = vunpack.c.h.b16 %v126
  %v685 = vunpack.c.l.b16 %v127
  %v686 = vunpack.c.h.b16 %v127
  %v687 = vunpack.c.l.b16 %v128
  %v688 = vunpack.c.h.b16 %v128
  %v689 = vunpack.c.l.b16 %v129
  %v690 = vunpack.c.h.b16 %v129
  %v691 = vunpack.c.l.b16 %v130
  %v692 = vunpack.c.h.b16 %v130
  %v693 = vunpack.c.l.b16 %v131
  %v694 = vunpack.c.h.b16 %v131
  %v695 = vunpack.c.l.b16 %v132
  %v696 = vunpack.c.h.b16 %v132
  %v697 = vunpack.c.l.b16 %v133
  %v698 = vunpack.c.h.b16 %v133
  %v699 = vunpack.c.l.b16 %v134
  %v700 = vunpack.c.h.b16 %v134
  %v701 = vunpack.c.l.b16 %v135
  %v702 = vunpack.c.h.b16 %v135
  %v703 = vunpack.c.l.b16 %v136
  %v704 = vunpack.c.h.b16 %v136
  %v705 = vunpack.c.l.b16 %v137
  %v706 = vunpack.c.h.b16 %v137
  %v707 = vunpack.c.l.b16 %v138
  %v708 = vunpack.c.h.b16 %v138
  %v709 = vunpack.c.l.b16 %v139
  %v710 = vunpack.c.h.b16 %v139
  %v711 = vunpack.c.l.b16 %v140
  %v712 = vunpack.c.h.b16 %v140
  %v713 = vunpack.c.l.b16 %v141
  %v714 = vunpack.c.h.b16 %v141
  %v715 = vunpack.c.l.b16 %v142
  %v716 = vunpack.c.h.b16 %v142
  %v717 = vunpack.c.l.b16 %v143
  %v718 = vunpack.c.h.b16 %v143
  %v719 = vunpack.c.l.b16 %v144
  %v720 = vunpack.c.h.b16 %v144
  %v721 = vunpack.c.l.b16 %v145
  %v722 = vunpack.c.h.b16 %v145
  %v723 = vunpack.c.l.b16 %v146
  %v724 = vunpack.c.h.b16 %v146
  %v725 = vunpack.c.l.b16 %v147
  %v726 = vunpack.c.h.b16 %v147
  %v727 = vunpack.c.l.b16 %v148
  %v728 = vunpack.c.h.b16 %v148
  %v729 = vunpack.c.l.b16 %v149
  %v730 = vunpack.c.h.b16 %v149
  %v731 = vunpack.c.l.b16 %v150
  %v732 = vunpack.c.h.b16 %v150
  %v733 = vunpack.c.l.b16 %v151
  %v734 = vunpack.c.h.b16 %v151
  %v735 = vunpack.c.l.b16 %v152
  %v736 = vunpack.c.h.b16 %v152
  %v737 = vunpack.c.l.b16 %v153
  %v738 = vunpack.c.h.b16 %v153
  %v739 = vunpack.c.l.b16 %v154
  %v740 = vunpack.c.h.b16 %v154
  %v741 = vunpack.c.l.b16 %v155
  %v742 = vunpack.c.h.b16 %v155
  %v743 = vunpack.c.l.b16 %v156
  %v744 = vunpack.c.h.b16 %v156
  %v745 = vunpack.c.l.b16 %v157
  %v746 = vunpack.c.h.b16 %v157
  %v747 = vunpack.c.l.b16 %v158
  %v748 = vunpack.c.h.b16 %v158
  %v749 = vunpack.c.l.b16 %v159
  %v750 = vunpack.c.h.b16 %v159
  %v751 = vunpack.c.l.b16 %v160
  %v752 = vunpack.c.h.b16 %v160
  %v753 = vunpack.c.l.b16 %v161
  %v754 = vunpack.c.h.b16 %v161
  %v755 = vunpack.c.l.b16 %v162
  %v756 = vunpack.c.h.b16 %v162
  %v757 = vunpack.c.l.b16 %v163
  %v758 = vunpack.c.h.b16 %v163
  %v759 = vunpack.c.l.b16 %v164
  %v760 = vunpack.c.h.b16 %v164
  %v761 = vunpack.c.l.b16 %v165
  %v762 = vunpack.c.h.b16 %v165
  %v763 = vunpack.c.l.b16 %v166
  %v764 = vunpack.c.h.b16 %v166
  %v765 = vunpack.c.l.b16 %v167
  %v766 = vunpack.c.h.b16 %v167
  %v767 = vunpack.c.l.b16 %v168
  %v768 = vunpack.c.h.b16 %v168
  %v769 = vunpack.c.l.b16 %v169
  %v770 = vunpack.c.h.b16 %v169
  %v771 = vunpack.c.l.b16 %v170
  %v772 = vunpack.c.h.b16 %v170
  %v773 = vunpack.c.l.b16 %v171
  %v774 = vunpack.c.h.b16 %v171
  %v775 = vunpack.c.l.b16 %v172
  %v776 = vunpack.c.h.b16 %v172
  %v777 = vunpack.c.l.b16 %v173
  %v778 = vunpack.c.h.b16 %v173
  %v779 = vunpack.c.l.b16 %v174
  %v780 = vunpack.c.h.b16 %v174
  %v781 = vunpack.c.l.b16 %v175
  %v782 = vunpack.c.h.b16 %v175
  %v783 = vunpack.c.l.b16 %v176
  %v784 = vunpack.c.h.b16 %v176
  %v785 = vunpack.c.l.b16 %v177
  %v786 = vunpack.c.h.b16 %v177
  %v787 = vunpack.c.l.b16 %v178
  %v788 = vunpack.c.h.b16 %v178
  %v789 = vunpack.c.l.b16 %v179
  %v790 = vunpack.c.h.b16 %v179
  %v791 = vunpack.c.l.b16 %v180
  %v792 = vunpack.c.h.b16 %v180
  %v793 = vunpack.c.l.b16 %v181
  %v794 = vunpack.c.h.b16 %v181
  %v795 = vunpack.c.l.b16 %v182
  %v796 = vunpack.c.h.b16 %v182
  %v797 = vunpack.c.l.b16 %v183
  %v798 = vunpack.c.h.b16 %v183
  %v799 = vunpack.c.l.b16 %v184
  %v800 = vunpack.c.h.b16 %v184
  %v801 = vunpack.c.l.b16 %v185
  %v802 = vunpack.c.h.b16 %v185
  %v803 = vunpack.c.l.b16 %v186
  %v804 = vunpack.c.h.b16 %v186
  %v805 = vunpack.c.l.b16 %v187
  %v806 = vunpack.c.h.b16 %v187
  %v807 = vunpack.c.l.b16 %v188
  %v808 = vunpack.c.h.b16 %v188
  %v809 = vunpack.c.l.b16 %v189
  %v810 = vunpack.c.h.b16 %v189
  %v811 = vunpack.c.l.b16 %v190
  %v812 = vunpack.c.h.b16 %v190
  %v813 = vunpack.c.l.b16 %v191
  %v814 = vunpack.c.h.b16 %v191
  %v815 = vunpack.c.l.b16 %v192
  %v816 = vunpack.c.h.b16 %v192
  %v817 = vunpack.c.l.b16 %v193
  %v818 = vunpack.c.h.b16 %v193
  %v819 = vunpack.c.l.b16 %v194
  %v820 = vunpack.c.h.b16 %v194
  %v821 = vunpack.c.l.b16 %v195
  %v822 = vunpack.c.h.b16 %v195
  %v823 = vunpack.c.l.b16 %v196
  %v824 = vunpack.c.h.b16 %v196
  %v825 = vunpack.c.l.b16 %v197
  %v826 = vunpack.c.h.b16 %v197
  %v827 = vunpack.c.l.b16 %v198
  %v828 = vunpack.c.h.b16 %v198
  %v829 = vunpack.c.l.b16 %v199
  %v830 = vunpack.c.h.b16 %v199
  %v831 = vunpack.c.l.b16 %v200
  %v832 = vunpack.c.h.b16 %v200
  %v833 = vunpack.c.l.b16 %v201
  %v834 = vunpack.c.h.b16 %v201
  %v835 = vunpack.c.l.b16 %v202
  %v836 = vunpack.c.h.b16 %v202
  %v837 = vunpack.c.l.b16 %v203
  %v838 = vunpack.c.h.b16 %v203
  %v839 = vunpack.c.l.b16 %v204
  %v840 = vunpack.c.h.b16 %v204
  %v841 = vunpack.c.l.b16 %v205
  %v842 = vunpack.c.h.b16 %v205
  %v843 = vunpack.c.l.b16 %v206
  %v844 = vunpack.c.h.b16 %v206
  %v845 = vunpack.c.l.b16 %v207
  %v846 = vunpack.c.h.b16 %v207
  %v847 = vunpack.c.l.b16 %v208
  %v848 = vunpack.c.h.b16 %v208
  %v849 = vunpack.c.l.b16 %v209
  %v850 = vunpack.c.h.b16 %v209
  %v851 = vunpack.c.l.b16 %v210
  %v852 = vunpack.c.h.b16 %v210
  %v853 = vunpack.c.l.b16 %v211
  %v854 = vunpack.c.h.b16 %v211
  %v855 = vunpack.c.l.b16 %v212
  %v856 = vunpack.c.h.b16 %v212
  %v857 = vunpack.c.l.b16 %v213
  %v858 = vunpack.c.h.b16 %v213
  %v859 = vunpack.c.l.b16 %v214
  %v860 = vunpack.c.h.b16 %v214
  %v861 = vunpack.c.l.b16 %v215
  %v862 = vunpack.c.h.b16 %v215
  %v863 = vunpack.c.l.b16 %v216
  %v864 = vunpack.c.h.b16 %v216
  %v865 = vunpack.c.l.b16 %v217
  %v866 = vunpack.c.h.b16 %v217
  %v867 = vpack.c.b16 %v487, %v483
  %v868 = vpack.c.b16 %v488, %v484
  %v869 = vpack.c.b16 %v489, %v485
  %v870 = vpack.c.b16 %v490, %v486
  %v871 = vpack.c.b16 %v495, %v491
  %v872 = vpack.c.b16 %v496, %v492
  %v873 = vpack.c.b16 %v497, %v493
  %v874 = vpack.c.b16 %v498, %v494
  %v875 = vpack.c.b16 %v503, %v499
  %v876 = vpack.c.b16 %v504, %v500
  %v877 = vpack.c.b16 %v505, %v501
  %v878 = vpack.c.b16 %v506, %v502
  %v879 = vpack.c.b16 %v511, %v507
  %v880 = vpack.c.b16 %v512, %v508
  %v881 = vpack.c.b16 %v513, %v509
  %v882 = vpack.c.b16 %v514, %v510
  %v883 = vpack.c.b16 %v519, %v515
  %v884 = vpack.c.b16 %v520, %v516
  %v885 = vpack.c.b16 %v521, %v517
  %v886 = vpack.c.b16 %v522, %v518
  %v887 = vpack.c.b16 %v527, %v523
  %v888 = vpack.c.b16 %v528, %v524
  %v889 = vpack.c.b16 %v529, %v525
  %v890 = vpack.c.b16 %v530, %v526
  %v891 = vpack.c.b16 %v535, %v531
  %v892 = vpack.c.b16 %v536, %v532
  %v893 = vpack.c.b16 %v537, %v533
  %v894 = vpack.c.b16 %v538, %v534
  %v895 = vpack.c.b16 %v543, %v539
  %v896 = vpack.c.b16 %v544, %v540
  %v897 = vpack.c.b16 %v545, %v541
  %v898 = vpack.c.b16 %v546, %v542
  %v899 = vpack.c.b16 %v551, %v547
  %v900 = vpack.c.b16 %v552, %v548
  %v901 = vpack.c.b16 %v553, %v549
  %v902 = vpack.c.b16 %v554, %v550
  %v903 = vpack.c.b16 %v559, %v555
  %v904 = vpack.c.b16 %v560, %v556
  %v905 = vpack.c.b16 %v561, %v557
  %v906 = vpack.c.b16 %v562, %v558
  %v907 = vpack.c.b16 %v567, %v563
  %v908 = vpack.c.b16 %v568, %v564
  %v909 = vpack.c.b16 %v569, %v565
  %v910 = vpack.c.b16 %v570, %v566
  %v911 = vpack.c.b16 %v575, %v571
  %v912 = vpack.c.b16 %v576, %v572
  %v913 = vpack.c.b16 %v577, %v573
  %v914 = vpack.c.b16 %v578, %v574
  %v915 = vpack.c.b16 %v583, %v579
  %v916 = vpack.c.b16 %v584, %v580
  %v917 = vpack.c.b16 %v585, %v581
  %v918 = vpack.c.b16 %v586, %v582
  %v919 = vpack.c.b16 %v591, %v587
  %v920 = vpack.c.b16 %v592, %v588
  %v921 = vpack.c.b16 %v593, %v589
  %v922 = vpack.c.b16 %v594, %v590
  %v923 = vpack.c.b16 %v599, %v595
  %v924 = vpack.c.b16 %v600, %v596
  %v925 = vpack.c.b16 %v601, %v597
  %v926 = vpack.c.b16 %v602, %v598
  %v927 = vpack.c.b16 %v607, %v603
  %v928 = vpack.c.b16 %v608, %v604
  %v929 = vpack.c.b16 %v609, %v605
  %v930 = vpack.c.b16 %v610, %v606
  %v931 = vpack.c.b16 %v615, %v611
  %v932 = vpack.c.b16 %v616, %v612
  %v933 = vpack.c.b16 %v617, %v613
  %v934 = vpack.c.b16 %v618, %v614
  %v935 = vpack.c.b16 %v623, %v619
  %v936 = vpack.c.b16 %v624, %v620
  %v937 = vpack.c.b16 %v625, %v621
  %v938 = vpack.c.b16 %v626, %v622
  %v939 = vpack.c.b16 %v631, %v627
  %v940 = vpack.c.b16 %v632, %v628
  %v941 = vpack.c.b16 %v633, %v629
  %v942 = vpack.c.b16 %v634, %v630
  %v943 = vpack.c.b16 %v639, %v635
  %v944 = vpack.c.b16 %v640, %v636
  %v945 = vpack.c.b16 %v641, %v637
  %v946 = vpack.c.b16 %v642, %v638
  %v947 = vpack.c.b16 %v647, %v643
  %v948 = vpack.c.b16 %v648, %v644
  %v949 = vpack.c.b16 %v649, %v645
  %v950 = vpack.c.b16 %v650, %v646
  %v951 = vpack.c.b16 %v655, %v651
  %v952 = vpack.c.b16 %v656, %v652
  %v953 = vpack.c.b16 %v657, %v653
  %v954 = vpack.c.b16 %v658, %v654
  %v955 = vpack.c.b16 %v663, %v659
  %v956 = vpack.c.b16 %v664, %v660
  %v957 = vpack.c.b16 %v665, %v661
  %v958 = vpack.c.b16 %v666, %v662
  %v959 = vpack.c.b16 %v671, %v667
  %v960 = vpack.c.b16 %v672, %v668
  %v961 = vpack.c.b16 %v673, %v669
  %v962 = vpack.c.b16 %v674, %v670
  %v963 = vpack.c.b16 %v679, %v675
  %v964 = vpack.c.b16 %v680, %v676
  %v965 = vpack.c.b16 %v681, %v677
  %v966 = vpack.c.b16 %v682, %v678
  %v967 = vpack.c.b16 %v687, %v683
  %v968 = vpack.c.b16 %v688, %v684
  %v969 = vpack.c.b16 %v689, %v685
  %v970 = vpack.c.b16 %v690, %v686
  %v971 = vpack.c.b16 %v695, %v691
  %v972 = vpack.c.b16 %v696, %v692
  %v973 = vpack.c.b16 %v697, %v693
  %v974 = vpack.c.b16 %v698, %v694
  %v975 = vpack.c.b16 %v703, %v699
  %v976 = vpack.c.b16 %v704, %v700
  %v977 = vpack.c.b16 %v705, %v701
  %v978 = vpack.c.b16 %v706, %v702
  %v979 = vpack.c.b16 %v711, %v707
  %v980 = vpack.c.b16 %v712, %v708
  %v981 = vpack.c.b16 %v713, %v709
  %v982 = vpack.c.b16 %v714, %v710
  %v983 = vpack.c.b16 %v719, %v715
  %v984 = vpack.c.b16 %v720, %v716
  %v985 = vpack.c.b16 %v721, %v717
  %v986 = vpack.c.b16 %v722, %v718
  %v987 = vpack.c.b16 %v727, %v723
  %v988 = vpack.c.b16 %v728, %v724
  %v989 = vpack.c.b16 %v729, %v725
  %v990 = vpack.c.b16 %v730, %v726
  %v991 = vpack.c.b16 %v735, %v731
  %v992 = vpack.c.b16 %v736, %v732
  %v993 = vpack.c.b16 %v737, %v733
  %v994 = vpack.c.b16 %v738, %v734
  %v995 = vpack.c.b16 %v743, %v739
  %v996 = vpack.c.b16 %v744, %v740
  %v997 = vpack.c.b16 %v745, %v741
  %v998 = vpack.c.b16 %v746, %v742
  %v999 = vpack.c.b16 %v751, %v747
  %v1000 = vpack.c.b16 %v752, %v748
  %v1001 = vpack.c.b16 %v753, %v749
  %v1002 = vpack.c.b16 %v754, %v750
  %v1003 = vpack.c.b16 %v759, %v755
  %v1004 = vpack.c.b16 %v760, %v756
  %v1005 = vpack.c.b16 %v761, %v757
  %v1006 = vpack.c.b16 %v762, %v758
  %v1007 = vpack.c.b16 %v767, %v763
  %v1008 = vpack.c.b16 %v768, %v764
  %v1009 = vpack.c.b16 %v769, %v765
  %v1010 = vpack.c.b16 %v770, %v766
  %v1011 = vpack.c.b16 %v775, %v771
  %v1012 = vpack.c.b16 %v776, %v772
  %v1013 = vpack.c.b16 %v777, %v773
  %v1014 = vpack.c.b16 %v778, %v774
  %v1015 = vpack.c.b16 %v783, %v779
  %v1016 = vpack.c.b16 %v784, %v780
  %v1017 = vpack.c.b16 %v785, %v781
  %v1018 = vpack.c.b16 %v786, %v782
  %v1019 = vpack.c.b16 %v791, %v787
  %v1020 = vpack.c.b16 %v792, %v788
  %v1021 = vpack.c.b16 %v793, %v789
  %v1022 = vpack.c.b16 %v794, %v790
  %v1023 = vpack.c.b16 %v799, %v795
  %v1024 = vpack.c.b16 %v800, %v796
  %v1025 = vpack.c.b16 %v801, %v797
  %v1026 = vpack.c.b16 %v802, %v798
  %v1027 = vpack.c.b16 %v807, %v803
  %v1028 = vpack.c.b16 %v808, %v804
  %v1029 = vpack.c.b16 %v809, %v805
  %v1030 = vpack.c.b16 %v810, %v806
  %v1031 = vpack.c.b16 %v815, %v811
  %v1032 = vpack.c.b16 %v816, %v812
  %v1033 = vpack.c.b16 %v817, %v813
  %v1034 = vpack.c.b16 %v818, %v814
  %v1035 = vpack.c.b16 %v823, %v819
  %v1036 = vpack.c.b16 %v824, %v820
  %v1037 = vpack.c.b16 %v825, %v821
  %v1038 = vpack.c.b16 %v826, %v822
  %v1039 = vpack.c.b16 %v831, %v827
  %v1040 = vpack.c.b16 %v832, %v828
  %v1041 = vpack.c.b16 %v833, %v829
  %v1042 = vpack.c.b16 %v834, %v830
  %v1043 = vpack.c.b16 %v839, %v835
  %v1044 = vpack.c.b16 %v840, %v836
  %v1045 = vpack.c.b16 %v841, %v837
  %v1046 = vpack.c.b16 %v842, %v838
  %v1047 = vpack.c.b16 %v847, %v843
  %v1048 = vpack.c.b16 %v848, %v844
  %v1049 = vpack.c.b16 %v849, %v845
  %v1050 = vpack.c.b16 %v850, %v846
  %v1051 = vpack.c.b16 %v855, %v851
  %v1052 = vpack.c.b16 %v856, %v852
  %v1053 = vpack.c.b16 %v857, %v853
  %v1054 = vpack.c.b16 %v858, %v854
  %v1055 = vpack.c.b16 %v863, %v859
  %v1056 = vpack.c.b16 %v864, %v860
  %v1057 = vpack.c.b16 %v865, %v861
  %v1058 = vpack.c.b16 %v866, %v862
  %1251 = vmatprep.subr.bf16.mxu0 %v896
  %1252 = vmatpush1.bf16.msra.mxu0 %v895
  %1253 = vmatprep.subr.bf16.mxu0 %v892
  %1254 = vmatpush1.bf16.msra.mxu0 %v891
  %1255 = vmatprep.subr.bf16.mxu0 %v888
  %1256 = vmatpush1.bf16.msra.mxu0 %v887
  %1257 = vmatprep.subr.bf16.mxu0 %v884
  %1258 = vmatpush1.bf16.msra.mxu0 %v883
  %1259 = vmatprep.subr.bf16.mxu0 %v880
  %1260 = vmatpush1.bf16.msra.mxu0 %v879
  %1261 = vmatprep.subr.bf16.mxu0 %v876
  %1262 = vmatpush1.bf16.msra.mxu0 %v875
  %1263 = vmatprep.subr.bf16.mxu0 %v872
  %1264 = vmatpush1.bf16.msra.mxu0 %v871
  %1265 = vmatprep.subr.bf16.mxu0 %v868
  %1266 = vmatpush1.bf16.msra.mxu0 %v867
  %1267 = vmatprep.subr.bf16.mxu0 %v928
  %1268 = vmatpush2.bf16.msra.mxu0 %v927
  %1269 = vmatprep.subr.bf16.mxu0 %v924
  %1270 = vmatpush2.bf16.msra.mxu0 %v923
  %1271 = vmatprep.subr.bf16.mxu0 %v920
  %1272 = vmatpush2.bf16.msra.mxu0 %v919
  %1273 = vmatprep.subr.bf16.mxu0 %v916
  %1274 = vmatpush2.bf16.msra.mxu0 %v915
  %1275 = vmatprep.subr.bf16.mxu0 %v912
  %1276 = vmatpush2.bf16.msra.mxu0 %v911
  %1277 = vmatprep.subr.bf16.mxu0 %v908
  %1278 = vmatpush2.bf16.msra.mxu0 %v907
  %1279 = vmatprep.subr.bf16.mxu0 %v904
  %1280 = vmatpush2.bf16.msra.mxu0 %v903
  %1281 = vmatprep.subr.bf16.mxu0 %v900
  %1282 = vmatpush2.bf16.msra.mxu0 %v899
  %1283 = vmatprep.mubr.bf16.mxu0 %v268
  %1284 = vmatmul.mubr.bf16.gmra.mxu0 %v267
  %v1285 = vpop.f32.mrf.mxu0
  %v1286 = vadd.f32 %v223, %v1285
  %v1287 = vpop.f32.mrf.mxu0
  %v1288 = vadd.f32 %v227, %v1287
  %v1289 = vpop.f32.mrf.mxu0
  %v1290 = vadd.f32 %v223, %v1289
  %v1291 = vpop.f32.mrf.mxu0
  %v1292 = vadd.f32 %v227, %v1291
  %1293 = vmatprep.mubr.bf16.mxu0 %v274
  %1294 = vmatmul.mubr.bf16.gmra.mxu0 %v273
  %v1295 = vpop.f32.mrf.mxu0
  %v1296 = vadd.f32 %v223, %v1295
  %v1297 = vpop.f32.mrf.mxu0
  %v1298 = vadd.f32 %v227, %v1297
  %v1299 = vpop.f32.mrf.mxu0
  %v1300 = vpop.f32.mrf.mxu0
  %1301 = vdwg.mxu0
  %1302 = vmatprep.subr.bf16.mxu0 %v960
  %1303 = vmatpush1.bf16.msra.mxu0 %v959
  %1304 = vmatprep.subr.bf16.mxu0 %v956
  %1305 = vmatpush1.bf16.msra.mxu0 %v955
  %1306 = vmatprep.subr.bf16.mxu0 %v952
  %1307 = vmatpush1.bf16.msra.mxu0 %v951
  %1308 = vmatprep.subr.bf16.mxu0 %v948
  %1309 = vmatpush1.bf16.msra.mxu0 %v947
  %1310 = vmatprep.subr.bf16.mxu0 %v944
  %1311 = vmatpush1.bf16.msra.mxu0 %v943
  %1312 = vmatprep.subr.bf16.mxu0 %v940
  %1313 = vmatpush1.bf16.msra.mxu0 %v939
  %1314 = vmatprep.subr.bf16.mxu0 %v936
  %1315 = vmatpush1.bf16.msra.mxu0 %v935
  %1316 = vmatprep.subr.bf16.mxu0 %v932
  %1317 = vmatpush1.bf16.msra.mxu0 %v931
  %1318 = vmatprep.subr.bf16.mxu0 %v992
  %1319 = vmatpush2.bf16.msra.mxu0 %v991
  %1320 = vmatprep.subr.bf16.mxu0 %v988
  %1321 = vmatpush2.bf16.msra.mxu0 %v987
  %1322 = vmatprep.subr.bf16.mxu0 %v984
  %1323 = vmatpush2.bf16.msra.mxu0 %v983
  %1324 = vmatprep.subr.bf16.mxu0 %v980
  %1325 = vmatpush2.bf16.msra.mxu0 %v979
  %1326 = vmatprep.subr.bf16.mxu0 %v976
  %1327 = vmatpush2.bf16.msra.mxu0 %v975
  %1328 = vmatprep.subr.bf16.mxu0 %v972
  %1329 = vmatpush2.bf16.msra.mxu0 %v971
  %1330 = vmatprep.subr.bf16.mxu0 %v968
  %1331 = vmatpush2.bf16.msra.mxu0 %v967
  %1332 = vmatprep.subr.bf16.mxu0 %v964
  %1333 = vmatpush2.bf16.msra.mxu0 %v963
  %1334 = vmatprep.mubr.bf16.mxu0 %v270
  %1335 = vmatmul.mubr.bf16.gmra.mxu0 %v269
  %v1336 = vpop.f32.mrf.mxu0
  %v1337 = vadd.f32 %v1286, %v1336
  %v1338 = vpop.f32.mrf.mxu0
  %v1339 = vadd.f32 %v1288, %v1338
  %v1340 = vpop.f32.mrf.mxu0
  %v1341 = vadd.f32 %v1290, %v1340
  %v1342 = vpop.f32.mrf.mxu0
  %v1343 = vadd.f32 %v1292, %v1342
  %1344 = vmatprep.mubr.bf16.mxu0 %v276
  %1345 = vmatmul.mubr.bf16.gmra.mxu0 %v275
  %v1346 = vpop.f32.mrf.mxu0
  %v1347 = vadd.f32 %v1296, %v1346
  %v1348 = vpop.f32.mrf.mxu0
  %v1349 = vadd.f32 %v1298, %v1348
  %v1350 = vpop.f32.mrf.mxu0
  %v1351 = vpop.f32.mrf.mxu0
  %1352 = vdwg.mxu0
  %1353 = vmatprep.subr.bf16.mxu0 %v1024
  %1354 = vmatpush1.bf16.msra.mxu0 %v1023
  %1355 = vmatprep.subr.bf16.mxu0 %v1020
  %1356 = vmatpush1.bf16.msra.mxu0 %v1019
  %1357 = vmatprep.subr.bf16.mxu0 %v1016
  %1358 = vmatpush1.bf16.msra.mxu0 %v1015
  %1359 = vmatprep.subr.bf16.mxu0 %v1012
  %1360 = vmatpush1.bf16.msra.mxu0 %v1011
  %1361 = vmatprep.subr.bf16.mxu0 %v1008
  %1362 = vmatpush1.bf16.msra.mxu0 %v1007
  %1363 = vmatprep.subr.bf16.mxu0 %v1004
  %1364 = vmatpush1.bf16.msra.mxu0 %v1003
  %1365 = vmatprep.subr.bf16.mxu0 %v1000
  %1366 = vmatpush1.bf16.msra.mxu0 %v999
  %1367 = vmatprep.subr.bf16.mxu0 %v996
  %1368 = vmatpush1.bf16.msra.mxu0 %v995
  %1369 = vmatprep.subr.bf16.mxu0 %v1056
  %1370 = vmatpush2.bf16.msra.mxu0 %v1055
  %1371 = vmatprep.subr.bf16.mxu0 %v1052
  %1372 = vmatpush2.bf16.msra.mxu0 %v1051
  %1373 = vmatprep.subr.bf16.mxu0 %v1048
  %1374 = vmatpush2.bf16.msra.mxu0 %v1047
  %1375 = vmatprep.subr.bf16.mxu0 %v1044
  %1376 = vmatpush2.bf16.msra.mxu0 %v1043
  %1377 = vmatprep.subr.bf16.mxu0 %v1040
  %1378 = vmatpush2.bf16.msra.mxu0 %v1039
  %1379 = vmatprep.subr.bf16.mxu0 %v1036
  %1380 = vmatpush2.bf16.msra.mxu0 %v1035
  %1381 = vmatprep.subr.bf16.mxu0 %v1032
  %1382 = vmatpush2.bf16.msra.mxu0 %v1031
  %1383 = vmatprep.subr.bf16.mxu0 %v1028
  %1384 = vmatpush2.bf16.msra.mxu0 %v1027
  %1385 = vmatprep.mubr.bf16.mxu0 %v272
  %1386 = vmatmul.mubr.bf16.gmra.mxu0 %v271
  %v1387 = vpop.f32.mrf.mxu0
  %v1388 = vadd.f32 %v1337, %v1387
  %v1389 = vpop.f32.mrf.mxu0
  %v1390 = vadd.f32 %v1339, %v1389
  %v1391 = vpop.f32.mrf.mxu0
  %v1392 = vadd.f32 %v1341, %v1391
  %v1393 = vpop.f32.mrf.mxu0
  %v1394 = vadd.f32 %v1343, %v1393
  %1395 = vmatprep.mubr.bf16.mxu0 %v278
  %1396 = vmatmul.mubr.bf16.gmra.mxu0 %v277
  %v1397 = vpop.f32.mrf.mxu0
  %v1398 = vadd.f32 %v1347, %v1397
  %v1399 = vpop.f32.mrf.mxu0
  %v1400 = vadd.f32 %v1349, %v1399
  %v1401 = vpop.f32.mrf.mxu0
  %v1402 = vpop.f32.mrf.mxu0
  %1403 = vdwg.mxu0
  %1404 = vmatprep.subr.bf16.mxu0 %v898
  %1405 = vmatpush1.bf16.msra.mxu0 %v897
  %1406 = vmatprep.subr.bf16.mxu0 %v894
  %1407 = vmatpush1.bf16.msra.mxu0 %v893
  %1408 = vmatprep.subr.bf16.mxu0 %v890
  %1409 = vmatpush1.bf16.msra.mxu0 %v889
  %1410 = vmatprep.subr.bf16.mxu0 %v886
  %1411 = vmatpush1.bf16.msra.mxu0 %v885
  %1412 = vmatprep.subr.bf16.mxu0 %v882
  %1413 = vmatpush1.bf16.msra.mxu0 %v881
  %1414 = vmatprep.subr.bf16.mxu0 %v878
  %1415 = vmatpush1.bf16.msra.mxu0 %v877
  %1416 = vmatprep.subr.bf16.mxu0 %v874
  %1417 = vmatpush1.bf16.msra.mxu0 %v873
  %1418 = vmatprep.subr.bf16.mxu0 %v870
  %1419 = vmatpush1.bf16.msra.mxu0 %v869
  %1420 = vmatprep.subr.bf16.mxu0 %v930
  %1421 = vmatpush2.bf16.msra.mxu0 %v929
  %1422 = vmatprep.subr.bf16.mxu0 %v926
  %1423 = vmatpush2.bf16.msra.mxu0 %v925
  %1424 = vmatprep.subr.bf16.mxu0 %v922
  %1425 = vmatpush2.bf16.msra.mxu0 %v921
  %1426 = vmatprep.subr.bf16.mxu0 %v918
  %1427 = vmatpush2.bf16.msra.mxu0 %v917
  %1428 = vmatprep.subr.bf16.mxu0 %v914
  %1429 = vmatpush2.bf16.msra.mxu0 %v913
  %1430 = vmatprep.subr.bf16.mxu0 %v910
  %1431 = vmatpush2.bf16.msra.mxu0 %v909
  %1432 = vmatprep.subr.bf16.mxu0 %v906
  %1433 = vmatpush2.bf16.msra.mxu0 %v905
  %1434 = vmatprep.subr.bf16.mxu0 %v902
  %1435 = vmatpush2.bf16.msra.mxu0 %v901
  %1436 = vmatprep.mubr.bf16.mxu0 %v268
  %1437 = vmatmul.mubr.bf16.gmra.mxu0 %v267
  %v1438 = vpop.f32.mrf.mxu0
  %v1439 = vadd.f32 %v231, %v1438
  %v1440 = vpop.f32.mrf.mxu0
  %v1441 = vadd.f32 %v235, %v1440
  %v1442 = vpop.f32.mrf.mxu0
  %v1443 = vadd.f32 %v231, %v1442
  %v1444 = vpop.f32.mrf.mxu0
  %v1445 = vadd.f32 %v235, %v1444
  %1446 = vmatprep.mubr.bf16.mxu0 %v274
  %1447 = vmatmul.mubr.bf16.gmra.mxu0 %v273
  %v1448 = vpop.f32.mrf.mxu0
  %v1449 = vadd.f32 %v231, %v1448
  %v1450 = vpop.f32.mrf.mxu0
  %v1451 = vadd.f32 %v235, %v1450
  %v1452 = vpop.f32.mrf.mxu0
  %v1453 = vpop.f32.mrf.mxu0
  %1454 = vdwg.mxu0
  %1455 = vmatprep.subr.bf16.mxu0 %v962
  %1456 = vmatpush1.bf16.msra.mxu0 %v961
  %1457 = vmatprep.subr.bf16.mxu0 %v958
  %1458 = vmatpush1.bf16.msra.mxu0 %v957
  %1459 = vmatprep.subr.bf16.mxu0 %v954
  %1460 = vmatpush1.bf16.msra.mxu0 %v953
  %1461 = vmatprep.subr.bf16.mxu0 %v950
  %1462 = vmatpush1.bf16.msra.mxu0 %v949
  %1463 = vmatprep.subr.bf16.mxu0 %v946
  %1464 = vmatpush1.bf16.msra.mxu0 %v945
  %1465 = vmatprep.subr.bf16.mxu0 %v942
  %1466 = vmatpush1.bf16.msra.mxu0 %v941
  %1467 = vmatprep.subr.bf16.mxu0 %v938
  %1468 = vmatpush1.bf16.msra.mxu0 %v937
  %1469 = vmatprep.subr.bf16.mxu0 %v934
  %1470 = vmatpush1.bf16.msra.mxu0 %v933
  %1471 = vmatprep.subr.bf16.mxu0 %v994
  %1472 = vmatpush2.bf16.msra.mxu0 %v993
  %1473 = vmatprep.subr.bf16.mxu0 %v990
  %1474 = vmatpush2.bf16.msra.mxu0 %v989
  %1475 = vmatprep.subr.bf16.mxu0 %v986
  %1476 = vmatpush2.bf16.msra.mxu0 %v985
  %1477 = vmatprep.subr.bf16.mxu0 %v982
  %1478 = vmatpush2.bf16.msra.mxu0 %v981
  %1479 = vmatprep.subr.bf16.mxu0 %v978
  %1480 = vmatpush2.bf16.msra.mxu0 %v977
  %1481 = vmatprep.subr.bf16.mxu0 %v974
  %1482 = vmatpush2.bf16.msra.mxu0 %v973
  %1483 = vmatprep.subr.bf16.mxu0 %v970
  %1484 = vmatpush2.bf16.msra.mxu0 %v969
  %1485 = vmatprep.subr.bf16.mxu0 %v966
  %1486 = vmatpush2.bf16.msra.mxu0 %v965
  %1487 = vmatprep.mubr.bf16.mxu0 %v270
  %1488 = vmatmul.mubr.bf16.gmra.mxu0 %v269
  %v1489 = vpop.f32.mrf.mxu0
  %v1490 = vadd.f32 %v1439, %v1489
  %v1491 = vpop.f32.mrf.mxu0
  %v1492 = vadd.f32 %v1441, %v1491
  %v1493 = vpop.f32.mrf.mxu0
  %v1494 = vadd.f32 %v1443, %v1493
  %v1495 = vpop.f32.mrf.mxu0
  %v1496 = vadd.f32 %v1445, %v1495
  %1497 = vmatprep.mubr.bf16.mxu0 %v276
  %1498 = vmatmul.mubr.bf16.gmra.mxu0 %v275
  %v1499 = vpop.f32.mrf.mxu0
  %v1500 = vadd.f32 %v1449, %v1499
  %v1501 = vpop.f32.mrf.mxu0
  %v1502 = vadd.f32 %v1451, %v1501
  %v1503 = vpop.f32.mrf.mxu0
  %v1504 = vpop.f32.mrf.mxu0
  %1505 = vdwg.mxu0
  %1506 = vmatprep.subr.bf16.mxu0 %v1026
  %1507 = vmatpush1.bf16.msra.mxu0 %v1025
  %1508 = vmatprep.subr.bf16.mxu0 %v1022
  %1509 = vmatpush1.bf16.msra.mxu0 %v1021
  %1510 = vmatprep.subr.bf16.mxu0 %v1018
  %1511 = vmatpush1.bf16.msra.mxu0 %v1017
  %1512 = vmatprep.subr.bf16.mxu0 %v1014
  %1513 = vmatpush1.bf16.msra.mxu0 %v1013
  %1514 = vmatprep.subr.bf16.mxu0 %v1010
  %1515 = vmatpush1.bf16.msra.mxu0 %v1009
  %1516 = vmatprep.subr.bf16.mxu0 %v1006
  %1517 = vmatpush1.bf16.msra.mxu0 %v1005
  %1518 = vmatprep.subr.bf16.mxu0 %v1002
  %1519 = vmatpush1.bf16.msra.mxu0 %v1001
  %1520 = vmatprep.subr.bf16.mxu0 %v998
  %1521 = vmatpush1.bf16.msra.mxu0 %v997
  %1522 = vmatprep.subr.bf16.mxu0 %v1058
  %1523 = vmatpush2.bf16.msra.mxu0 %v1057
  %1524 = vmatprep.subr.bf16.mxu0 %v1054
  %1525 = vmatpush2.bf16.msra.mxu0 %v1053
  %1526 = vmatprep.subr.bf16.mxu0 %v1050
  %1527 = vmatpush2.bf16.msra.mxu0 %v1049
  %1528 = vmatprep.subr.bf16.mxu0 %v1046
  %1529 = vmatpush2.bf16.msra.mxu0 %v1045
  %1530 = vmatprep.subr.bf16.mxu0 %v1042
  %1531 = vmatpush2.bf16.msra.mxu0 %v1041
  %1532 = vmatprep.subr.bf16.mxu0 %v1038
  %1533 = vmatpush2.bf16.msra.mxu0 %v1037
  %1534 = vmatprep.subr.bf16.mxu0 %v1034
  %1535 = vmatpush2.bf16.msra.mxu0 %v1033
  %1536 = vmatprep.subr.bf16.mxu0 %v1030
  %1537 = vmatpush2.bf16.msra.mxu0 %v1029
  %1538 = vmatprep.mubr.bf16.mxu0 %v272
  %1539 = vmatmul.mubr.bf16.gmra.mxu0 %v271
  %v1540 = vpop.f32.mrf.mxu0
  %v1541 = vadd.f32 %v1490, %v1540
  %v1542 = vpop.f32.mrf.mxu0
  %v1543 = vadd.f32 %v1492, %v1542
  %v1544 = vpop.f32.mrf.mxu0
  %v1545 = vadd.f32 %v1494, %v1544
  %v1546 = vpop.f32.mrf.mxu0
  %v1547 = vadd.f32 %v1496, %v1546
  %1548 = vmatprep.mubr.bf16.mxu0 %v278
  %1549 = vmatmul.mubr.bf16.gmra.mxu0 %v277
  %v1550 = vpop.f32.mrf.mxu0
  %v1551 = vadd.f32 %v1500, %v1550
  %v1552 = vpop.f32.mrf.mxu0
  %v1553 = vadd.f32 %v1502, %v1552
  %v1554 = vpop.f32.mrf.mxu0
  %v1555 = vpop.f32.mrf.mxu0
  %1556 = vdwg.mxu0
  %v1557 = vld [vmem:[%s1] sm:$0x3]
  %v1558 = vld [vmem:[%s1 + $0x2] sm:$0x3]
  %v1559 = vld [vmem:[%s1 + $0x4] sm:$0x3]
  %v1560 = vunpack.c.0.s8 %v1557
  %v1561 = vunpack.c.0.s8 %v1558
  %v1562 = vunpack.c.0.s8 %v1559
  %v1563 = vcvt.s32.f32 %v1560
  %v1564 = vcvt.s32.f32 %v1561
  %v1565 = vcvt.s32.f32 %v1562
  %vm1566 = vcmp.ne.f32.partialorder %v1563, 0.0
  %vm1567 = vcmp.ne.f32.partialorder %v1564, 0.0
  %vm1568 = vcmp.ne.f32.partialorder %v1565, 0.0
  %s1569 = scalar_lea.vmem %s3, 1
  %v1570 = vld [vmem:[%s1569] ss:$4 sm:$0xf]
  %v1571 = vsel %vm1566, 1, 0
  %v1572 = vsel %vm1567, 1, 0
  %v1573 = vsel %vm1568, 1, 0
  %1574 = vset.pattern.permute.xlu0 0
  %1575 = vperm.xlu0 %1574, %v1571
  %v1576 = vpop.permute.xlu0 %1575
  %1577 = vset.pattern.permute.xlu0 0
  %1578 = vperm.xlu0 %1577, %v1572
  %v1579 = vpop.permute.xlu0 %1578
  %1580 = vset.pattern.permute.xlu0 0
  %1581 = vperm.xlu0 %1580, %v1573
  %v1582 = vpop.permute.xlu0 %1581
  %vm1583 = vcmp.eq.s32.totalorder %v1576, 1
  %vm1584 = vcmp.eq.s32.totalorder %v1579, 1
  %vm1585 = vcmp.eq.s32.totalorder %v1582, 1
  %v1587 = vlaneseq
  %v1588 = vshrl.u32 %v1587, 7
  %v1589 = vsub.s32 0, %v1588
  %v1590 = vrot.slane %v1570, %v1589
  %v1591 = vlaneseq
  %v1592 = vshrl.u32 %v1591, 7
  %v1593 = vsub.s32 1, %v1592
  %v1594 = vrot.slane %v1570, %v1593
  %v1595 = vlaneseq
  %v1596 = vshrl.u32 %v1595, 7
  %v1597 = vsub.s32 2, %v1596
  %v1598 = vrot.slane %v1570, %v1597
  %v1599 = vlaneseq
  %v1600 = vshrl.u32 %v1599, 7
  %v1601 = vsub.s32 3, %v1600
  %v1602 = vrot.slane %v1570, %v1601
  %v1607 = vsel %vm1583, %v1590, %v1388
  %v1608 = vsel %vm1583, %v1594, %v1390
  %v1609 = vsel %vm1583, %v1598, %v1541
  %v1610 = vsel %vm1583, %v1602, %v1543
  %v1611 = vsel %vm1584, %v1590, %v1392
  %v1612 = vsel %vm1584, %v1594, %v1394
  %v1613 = vsel %vm1584, %v1598, %v1545
  %v1614 = vsel %vm1584, %v1602, %v1547
  %v1615 = vsel %vm1585, %v1590, %v1398
  %v1616 = vsel %vm1585, %v1594, %v1400
  %v1617 = vsel %vm1585, %v1598, %v1551
  %v1618 = vsel %vm1585, %v1602, %v1553
  %v1619 = vadd.f32 %v1607, %v1608
  %v1620 = vadd.f32 %v1619, %v1609
  %v1621 = vadd.f32 %v1620, %v1610
  %1622 = vadd.xlane.f32.xlu0 %v1621
  %v1623 = vpop.xlane.xlu0 %1622
  %v1624 = vadd.f32 %v1611, %v1612
  %v1625 = vadd.f32 %v1624, %v1613
  %v1626 = vadd.f32 %v1625, %v1614
  %1627 = vadd.xlane.f32.xlu0 %v1626
  %v1628 = vpop.xlane.xlu0 %1627
  %v1629 = vadd.f32 %v1615, %v1616
  %v1630 = vadd.f32 %v1629, %v1617
  %v1631 = vadd.f32 %v1630, %v1618
  %1632 = vadd.xlane.f32.xlu0 %v1631
  %v1633 = vpop.xlane.xlu0 %1632
  %v1634 = vrcp.pop 512.0
  %v1635 = vmul.f32 %v1623, %v1634
  %v1636 = vmul.f32 %v1628, %v1634
  %v1637 = vmul.f32 %v1633, %v1634
  %v1638 = vsub.f32 %v1607, %v1635
  %v1639 = vsub.f32 %v1608, %v1635
  %v1640 = vsub.f32 %v1609, %v1635
  %v1641 = vsub.f32 %v1610, %v1635
  %v1642 = vsub.f32 %v1611, %v1636
  %v1643 = vsub.f32 %v1612, %v1636
  %v1644 = vsub.f32 %v1613, %v1636
  %v1645 = vsub.f32 %v1614, %v1636
  %v1646 = vsub.f32 %v1615, %v1637
  %v1647 = vsub.f32 %v1616, %v1637
  %v1648 = vsub.f32 %v1617, %v1637
  %v1649 = vsub.f32 %v1618, %v1637
  %v1650 = vmul.f32 %v1638, %v1638
  %v1651 = vmul.f32 %v1639, %v1639
  %v1652 = vmul.f32 %v1640, %v1640
  %v1653 = vmul.f32 %v1641, %v1641
  %v1654 = vmul.f32 %v1642, %v1642
  %v1655 = vmul.f32 %v1643, %v1643
  %v1656 = vmul.f32 %v1644, %v1644
  %v1657 = vmul.f32 %v1645, %v1645
  %v1658 = vmul.f32 %v1646, %v1646
  %v1659 = vmul.f32 %v1647, %v1647
  %v1660 = vmul.f32 %v1648, %v1648
  %v1661 = vmul.f32 %v1649, %v1649
  %v1662 = vadd.f32 %v1650, %v1651
  %v1663 = vadd.f32 %v1662, %v1652
  %v1664 = vadd.f32 %v1663, %v1653
  %1665 = vadd.xlane.f32.xlu0 %v1664
  %v1666 = vpop.xlane.xlu0 %1665
  %v1667 = vadd.f32 %v1654, %v1655
  %v1668 = vadd.f32 %v1667, %v1656
  %v1669 = vadd.f32 %v1668, %v1657
  %1670 = vadd.xlane.f32.xlu0 %v1669
  %v1671 = vpop.xlane.xlu0 %1670
  %v1672 = vadd.f32 %v1658, %v1659
  %v1673 = vadd.f32 %v1672, %v1660
  %v1674 = vadd.f32 %v1673, %v1661
  %1675 = vadd.xlane.f32.xlu0 %v1674
  %v1676 = vpop.xlane.xlu0 %1675
  %v1677 = vmul.f32 %v1666, %v1634
  %v1678 = vmul.f32 %v1671, %v1634
  %v1679 = vmul.f32 %v1676, %v1634
  %v1680 = vadd.f32 %v1677, 1e-05
  %v1681 = vadd.f32 %v1678, 1e-05
  %v1682 = vadd.f32 %v1679, 1e-05
  %v1683 = vrsqrt.pop %v1680
  %v1684 = vrsqrt.pop %v1681
  %v1685 = vrsqrt.pop %v1682
  %v1686 = vmul.f32 %v1638, %v1683
  %v1687 = vmul.f32 %v1639, %v1683
  %v1688 = vmul.f32 %v1640, %v1683
  %v1689 = vmul.f32 %v1641, %v1683
  %v1690 = vmul.f32 %v1642, %v1684
  %v1691 = vmul.f32 %v1643, %v1684
  %v1692 = vmul.f32 %v1644, %v1684
  %v1693 = vmul.f32 %v1645, %v1684
  %v1694 = vmul.f32 %v1646, %v1685
  %v1695 = vmul.f32 %v1647, %v1685
  %v1696 = vmul.f32 %v1648, %v1685
  %v1697 = vmul.f32 %v1649, %v1685
  %s1698 = scalar_lea.vmem %s3, 2
  %v1699 = vld [vmem:[%s1698] ss:$4 sm:$0xf]
  %v1701 = vlaneseq
  %v1702 = vshrl.u32 %v1701, 7
  %v1703 = vsub.s32 0, %v1702
  %v1704 = vrot.slane %v1699, %v1703
  %v1705 = vlaneseq
  %v1706 = vshrl.u32 %v1705, 7
  %v1707 = vsub.s32 1, %v1706
  %v1708 = vrot.slane %v1699, %v1707
  %v1709 = vlaneseq
  %v1710 = vshrl.u32 %v1709, 7
  %v1711 = vsub.s32 2, %v1710
  %v1712 = vrot.slane %v1699, %v1711
  %v1713 = vlaneseq
  %v1714 = vshrl.u32 %v1713, 7
  %v1715 = vsub.s32 3, %v1714
  %v1716 = vrot.slane %v1699, %v1715
  %v1721 = vmul.f32 %v1686, %v1704
  %v1722 = vmul.f32 %v1687, %v1708
  %v1723 = vmul.f32 %v1688, %v1712
  %v1724 = vmul.f32 %v1689, %v1716
  %v1725 = vmul.f32 %v1690, %v1704
  %v1726 = vmul.f32 %v1691, %v1708
  %v1727 = vmul.f32 %v1692, %v1712
  %v1728 = vmul.f32 %v1693, %v1716
  %v1729 = vmul.f32 %v1694, %v1704
  %v1730 = vmul.f32 %v1695, %v1708
  %v1731 = vmul.f32 %v1696, %v1712
  %v1732 = vmul.f32 %v1697, %v1716
  %s1733 = scalar_lea.vmem %s3, 3
  %v1734 = vld [vmem:[%s1733] ss:$4 sm:$0xf]
  %v1736 = vlaneseq
  %v1737 = vshrl.u32 %v1736, 7
  %v1738 = vsub.s32 0, %v1737
  %v1739 = vrot.slane %v1734, %v1738
  %v1740 = vlaneseq
  %v1741 = vshrl.u32 %v1740, 7
  %v1742 = vsub.s32 1, %v1741
  %v1743 = vrot.slane %v1734, %v1742
  %v1744 = vlaneseq
  %v1745 = vshrl.u32 %v1744, 7
  %v1746 = vsub.s32 2, %v1745
  %v1747 = vrot.slane %v1734, %v1746
  %v1748 = vlaneseq
  %v1749 = vshrl.u32 %v1748, 7
  %v1750 = vsub.s32 3, %v1749
  %v1751 = vrot.slane %v1734, %v1750
  %v1756 = vadd.f32 %v1721, %v1739
  %v1757 = vadd.f32 %v1722, %v1743
  %v1758 = vadd.f32 %v1723, %v1747
  %v1759 = vadd.f32 %v1724, %v1751
  %v1760 = vadd.f32 %v1725, %v1739
  %v1761 = vadd.f32 %v1726, %v1743
  %v1762 = vadd.f32 %v1727, %v1747
  %v1763 = vadd.f32 %v1728, %v1751
  %v1764 = vadd.f32 %v1729, %v1739
  %v1765 = vadd.f32 %v1730, %v1743
  %v1766 = vadd.f32 %v1731, %v1747
  %v1767 = vadd.f32 %v1732, %v1751
  %v1768 = vpack.c.bf16 %v1760, %v1756
  %v1769 = vpack.c.bf16 %v1761, %v1757
  %v1770 = vpack.c.bf16 %v1762, %v1758
  %v1771 = vpack.c.bf16 %v1763, %v1759
  %v1772 = vpack.c.bf16 %v1764, %v1764
  %v1773 = vpack.c.bf16 %v1765, %v1765
  %v1774 = vpack.c.bf16 %v1766, %v1766
  %v1775 = vpack.c.bf16 %v1767, %v1767
  %v1784 = vunpack.c.l.b16 %v1768
  %v1785 = vunpack.c.l.b16 %v1769
  %v1786 = vunpack.c.l.b16 %v1770
  %v1787 = vunpack.c.l.b16 %v1771
  %v1788 = vunpack.c.h.b16 %v1768
  %v1789 = vunpack.c.h.b16 %v1769
  %v1790 = vunpack.c.h.b16 %v1770
  %v1791 = vunpack.c.h.b16 %v1771
  %v1792 = vunpack.c.l.b16 %v1772
  %v1793 = vunpack.c.l.b16 %v1773
  %v1794 = vunpack.c.l.b16 %v1774
  %v1795 = vunpack.c.l.b16 %v1775
  %v1796 = vpack.c.b16 %v1785, %v1784
  %v1797 = vpack.c.b16 %v1787, %v1786
  %v1798 = vpack.c.b16 %v1789, %v1788
  %v1799 = vpack.c.b16 %v1791, %v1790
  %v1800 = vpack.c.b16 %v1793, %v1792
  %v1801 = vpack.c.b16 %v1795, %v1794
  %1808 = vst [vmem:[%s4] sm:$0xff] %v1796
  %1809 = vst [vmem:[%s4 + $0x8] sm:$0xff] %v1797
  %1810 = vst [vmem:[%s4 + $0x10] sm:$0xff] %v1798
  %1811 = vst [vmem:[%s4 + $0x18] sm:$0xff] %v1799
  %1812 = vst [vmem:[%s4 + $0x20] sm:$0xff] %v1800
  %1813 = vst [vmem:[%s4 + $0x28] sm:$0xff] %v1801
  // Predicated region
  $region18: #{multimodal_encoder_head.3} parent=0 // pred_check
    _
  $region19: #{multimodal_encoder_head.3} parent=0 // pred_check_branch
    %1815 = sbr.rel (0) target = $region21
  $region20: #{multimodal_encoder_head.3} parent=0 // pred_region
    _
  $region21: #{multimodal_encoder_head.3} parent=0 // pred_fallthru
    _
  // Predicated region
  $region22: #{multimodal_encoder_head.3} parent=0 // pred_check
    _
  $region23: #{multimodal_encoder_head.3} parent=0 // pred_check_branch
    %1817 = sbr.rel (0) target = $region25
  $region24: #{multimodal_encoder_head.3} parent=0 // pred_region
    _
  $region25: #{multimodal_encoder_head.3} parent=0 // pred_fallthru
    _

// kernel: multimodal_encoder_head.2
$region0: #{multimodal_encoder_head.2}
  #allocation0 [shape = 'u32[]', space=smem, size = 0x4, offset = 0x4, fixed_abs, tag = 'smem constant byte address 0x4 - core index']
  #allocation1 [shape = 'u32[144,128]{1,0:T(1,128)}', space=vmem, size = 0x12000, scoped, tag = 'internal scratch']
  %s0 = inlined_call_operand.vmem [shape: bf16[16,768], index: 0, kind: input, shape index: {}]
  %s1 = inlined_call_operand.vmem [shape: s8[16,128], index: 1, kind: input, shape index: {}]
  %s2 = inlined_call_operand.vmem [shape: bf16[768,512], index: 2, kind: input, shape index: {}]
  %s3 = inlined_call_operand.vmem [shape: f32[4,512], index: 3, kind: input, shape index: {}]
  %s4 = inlined_call_operand.hbm [shape: bf16[16,512], index: 4, kind: output, shape index: {}]
  %s5 = sld [smem:[#allocation0]]
  $region26: #{multimodal_encoder_head.2} parent=0
    _
  %s7 = ssub.s32 1, %s5
  %s8 = scalar_select 0, %s7, %s5
  $region1: #{multimodal_encoder_head.2} parent=0
    #allocation2 [shape = 'u8[16384]{0}', space=vmem, size = 0x4000, scoped, tag = 'output window, operand 0, single buffered']
    #allocation3 [shape = 's32[1]{0}', space=sflag, size = 0x4, scoped, tag = 'scoped memory for multimodal_encoder_head.2']
    %9 = vsyncpa [#allocation3], 0
    // Predicated region
    $region2: #{multimodal_encoder_head.2} parent=1 // pred_check
      _
    $region3: #{multimodal_encoder_head.2} parent=1 // pred_check_branch
      %11 = sbr.rel (0) target = $region5
    $region4: #{multimodal_encoder_head.2} parent=1 // pred_region
      _
    $region5: #{multimodal_encoder_head.2} parent=1 // pred_fallthru
      _
    // Predicated region
    $region6: #{multimodal_encoder_head.2} parent=1 // pred_check
      _
    $region7: #{multimodal_encoder_head.2} parent=1 // pred_check_branch
      %13 = sbr.rel (0) target = $region9
    $region8: #{multimodal_encoder_head.2} parent=1 // pred_region
      _
    $region9: #{multimodal_encoder_head.2} parent=1 // pred_fallthru
      _
    // Predicated region
    $region10: #{multimodal_encoder_head.2} parent=1 // pred_check
      _
    $region11: #{multimodal_encoder_head.2} parent=1 // pred_check_branch
      %15 = sbr.rel (0) target = $region13
    $region12: #{multimodal_encoder_head.2} parent=1 // pred_region
      _
    $region13: #{multimodal_encoder_head.2} parent=1 // pred_fallthru
      _
    // Predicated region
    $region14: #{multimodal_encoder_head.2} parent=1 // pred_check
      _
    $region15: #{multimodal_encoder_head.2} parent=1 // pred_check_branch
      %17 = sbr.rel (0) target = $region17
    $region16: #{multimodal_encoder_head.2} parent=1 // pred_region
      _
    $region17: #{multimodal_encoder_head.2} parent=1 // pred_fallthru
      _
    %v18 = vld [vmem:[%s0] sm:$0xff]
    %v19 = vld [vmem:[%s0 + $0x8] sm:$0xff]
    %v20 = vld [vmem:[%s0 + $0x10] sm:$0xff]
    %v21 = vld [vmem:[%s0 + $0x18] sm:$0xff]
    %v22 = vld [vmem:[%s0 + $0x20] sm:$0xff]
    %v23 = vld [vmem:[%s0 + $0x28] sm:$0xff]
    %v24 = vld [vmem:[%s2] sm:$0xff]
    %v25 = vld [vmem:[%s2 + $0x8] sm:$0xff]
    %v26 = vld [vmem:[%s2 + $0x10] sm:$0xff]
    %v27 = vld [vmem:[%s2 + $0x18] sm:$0xff]
    %v28 = vld [vmem:[%s2 + $0x20] sm:$0xff]
    %v29 = vld [vmem:[%s2 + $0x28] sm:$0xff]
    %v30 = vld [vmem:[%s2 + $0x30] sm:$0xff]
    %v31 = vld [vmem:[%s2 + $0x38] sm:$0xff]
    %v32 = vld [vmem:[%s2 + $0x40] sm:$0xff]
    %v33 = vld [vmem:[%s2 + $0x48] sm:$0xff]
    %v34 = vld [vmem:[%s2 + $0x50] sm:$0xff]
    %v35 = vld [vmem:[%s2 + $0x58] sm:$0xff]
    %v36 = vld [vmem:[%s2 + $0x60] sm:$0xff]
    %v37 = vld [vmem:[%s2 + $0x68] sm:$0xff]
    %v38 = vld [vmem:[%s2 + $0x70] sm:$0xff]
    %v39 = vld [vmem:[%s2 + $0x78] sm:$0xff]
    %v40 = vld [vmem:[%s2 + $0x80] sm:$0xff]
    %v41 = vld [vmem:[%s2 + $0x88] sm:$0xff]
    %v42 = vld [vmem:[%s2 + $0x90] sm:$0xff]
    %v43 = vld [vmem:[%s2 + $0x98] sm:$0xff]
    %v44 = vld [vmem:[%s2 + $0xa0] sm:$0xff]
    %v45 = vld [vmem:[%s2 + $0xa8] sm:$0xff]
    %v46 = vld [vmem:[%s2 + $0xb0] sm:$0xff]
    %v47 = vld [vmem:[%s2 + $0xb8] sm:$0xff]
    %v48 = vld [vmem:[%s2 + $0xc0] sm:$0xff]
    %v49 = vld [vmem:[%s2 + $0xc8] sm:$0xff]
    %v50 = vld [vmem:[%s2 + $0xd0] sm:$0xff]
    %v51 = vld [vmem:[%s2 + $0xd8] sm:$0xff]
    %v52 = vld [vmem:[%s2 + $0xe0] sm:$0xff]
    %v53 = vld [vmem:[%s2 + $0xe8] sm:$0xff]
    %v54 = vld [vmem:[%s2 + $0xf0] sm:$0xff]
    %v55 = vld [vmem:[%s2 + $0xf8] sm:$0xff]
    %v56 = vld [vmem:[%s2 + $0x100] sm:$0xff]
    %v57 = vld [vmem:[%s2 + $0x108] sm:$0xff]
    %v58 = vld [vmem:[%s2 + $0x110] sm:$0xff]
    %v59 = vld [vmem:[%s2 + $0x118] sm:$0xff]
    %v60 = vld [vmem:[%s2 + $0x120] sm:$0xff]
    %v61 = vld [vmem:[%s2 + $0x128] sm:$0xff]
    %v62 = vld [vmem:[%s2 + $0x130] sm:$0xff]
    %v63 = vld [vmem:[%s2 + $0x138] sm:$0xff]
    %v64 = vld [vmem:[%s2 + $0x140] sm:$0xff]
    %v65 = vld [vmem:[%s2 + $0x148] sm:$0xff]
    %v66 = vld [vmem:[%s2 + $0x150] sm:$0xff]
    %v67 = vld [vmem:[%s2 + $0x158] sm:$0xff]
    %v68 = vld [vmem:[%s2 + $0x160] sm:$0xff]
    %v69 = vld [vmem:[%s2 + $0x168] sm:$0xff]
    %v70 = vld [vmem:[%s2 + $0x170] sm:$0xff]
    %v71 = vld [vmem:[%s2 + $0x178] sm:$0xff]
    %v72 = vld [vmem:[%s2 + $0x180] sm:$0xff]
    %v73 = vld [vmem:[%s2 + $0x188] sm:$0xff]
    %v74 = vld [vmem:[%s2 + $0x190] sm:$0xff]
    %v75 = vld [vmem:[%s2 + $0x198] sm:$0xff]
    %v76 = vld [vmem:[%s2 + $0x1a0] sm:$0xff]
    %v77 = vld [vmem:[%s2 + $0x1a8] sm:$0xff]
    %v78 = vld [vmem:[%s2 + $0x1b0] sm:$0xff]
    %v79 = vld [vmem:[%s2 + $0x1b8] sm:$0xff]
    %v80 = vld [vmem:[%s2 + $0x1c0] sm:$0xff]
    %v81 = vld [vmem:[%s2 + $0x1c8] sm:$0xff]
    %v82 = vld [vmem:[%s2 + $0x1d0] sm:$0xff]
    %v83 = vld [vmem:[%s2 + $0x1d8] sm:$0xff]
    %v84 = vld [vmem:[%s2 + $0x1e0] sm:$0xff]
    %v85 = vld [vmem:[%s2 + $0x1e8] sm:$0xff]
    %v86 = vld [vmem:[%s2 + $0x1f0] sm:$0xff]
    %v87 = vld [vmem:[%s2 + $0x1f8] sm:$0xff]
    %v88 = vld [vmem:[%s2 + $0x200] sm:$0xff]
    %v89 = vld [vmem:[%s2 + $0x208] sm:$0xff]
    %v90 = vld [vmem:[%s2 + $0x210] sm:$0xff]
    %v91 = vld [vmem:[%s2 + $0x218] sm:$0xff]
    %v92 = vld [vmem:[%s2 + $0x220] sm:$0xff]
    %v93 = vld [vmem:[%s2 + $0x228] sm:$0xff]
    %v94 = vld [vmem:[%s2 + $0x230] sm:$0xff]
    %v95 = vld [vmem:[%s2 + $0x238] sm:$0xff]
    %v96 = vld [vmem:[%s2 + $0x240] sm:$0xff]
    %v97 = vld [vmem:[%s2 + $0x248] sm:$0xff]
    %v98 = vld [vmem:[%s2 + $0x250] sm:$0xff]
    %v99 = vld [vmem:[%s2 + $0x258] sm:$0xff]
    %v100 = vld [vmem:[%s2 + $0x260] sm:$0xff]
    %v101 = vld [vmem:[%s2 + $0x268] sm:$0xff]
    %v102 = vld [vmem:[%s2 + $0x270] sm:$0xff]
    %v103 = vld [vmem:[%s2 + $0x278] sm:$0xff]
    %v104 = vld [vmem:[%s2 + $0x280] sm:$0xff]
    %v105 = vld [vmem:[%s2 + $0x288] sm:$0xff]
    %v106 = vld [vmem:[%s2 + $0x290] sm:$0xff]
    %v107 = vld [vmem:[%s2 + $0x298] sm:$0xff]
    %v108 = vld [vmem:[%s2 + $0x2a0] sm:$0xff]
    %v109 = vld [vmem:[%s2 + $0x2a8] sm:$0xff]
    %v110 = vld [vmem:[%s2 + $0x2b0] sm:$0xff]
    %v111 = vld [vmem:[%s2 + $0x2b8] sm:$0xff]
    %v112 = vld [vmem:[%s2 + $0x2c0] sm:$0xff]
    %v113 = vld [vmem:[%s2 + $0x2c8] sm:$0xff]
    %v114 = vld [vmem:[%s2 + $0x2d0] sm:$0xff]
    %v115 = vld [vmem:[%s2 + $0x2d8] sm:$0xff]
    %v116 = vld [vmem:[%s2 + $0x2e0] sm:$0xff]
    %v117 = vld [vmem:[%s2 + $0x2e8] sm:$0xff]
    %v118 = vld [vmem:[%s2 + $0x2f0] sm:$0xff]
    %v119 = vld [vmem:[%s2 + $0x2f8] sm:$0xff]
    %v120 = vld [vmem:[%s2 + $0x300] sm:$0xff]
    %v121 = vld [vmem:[%s2 + $0x308] sm:$0xff]
    %v122 = vld [vmem:[%s2 + $0x310] sm:$0xff]
    %v123 = vld [vmem:[%s2 + $0x318] sm:$0xff]
    %v124 = vld [vmem:[%s2 + $0x320] sm:$0xff]
    %v125 = vld [vmem:[%s2 + $0x328] sm:$0xff]
    %v126 = vld [vmem:[%s2 + $0x330] sm:$0xff]
    %v127 = vld [vmem:[%s2 + $0x338] sm:$0xff]
    %v128 = vld [vmem:[%s2 + $0x340] sm:$0xff]
    %v129 = vld [vmem:[%s2 + $0x348] sm:$0xff]
    %v130 = vld [vmem:[%s2 + $0x350] sm:$0xff]
    %v131 = vld [vmem:[%s2 + $0x358] sm:$0xff]
    %v132 = vld [vmem:[%s2 + $0x360] sm:$0xff]
    %v133 = vld [vmem:[%s2 + $0x368] sm:$0xff]
    %v134 = vld [vmem:[%s2 + $0x370] sm:$0xff]
    %v135 = vld [vmem:[%s2 + $0x378] sm:$0xff]
    %v136 = vld [vmem:[%s2 + $0x380] sm:$0xff]
    %v137 = vld [vmem:[%s2 + $0x388] sm:$0xff]
    %v138 = vld [vmem:[%s2 + $0x390] sm:$0xff]
    %v139 = vld [vmem:[%s2 + $0x398] sm:$0xff]
    %v140 = vld [vmem:[%s2 + $0x3a0] sm:$0xff]
    %v141 = vld [vmem:[%s2 + $0x3a8] sm:$0xff]
    %v142 = vld [vmem:[%s2 + $0x3b0] sm:$0xff]
    %v143 = vld [vmem:[%s2 + $0x3b8] sm:$0xff]
    %v144 = vld [vmem:[%s2 + $0x3c0] sm:$0xff]
    %v145 = vld [vmem:[%s2 + $0x3c8] sm:$0xff]
    %v146 = vld [vmem:[%s2 + $0x3d0] sm:$0xff]
    %v147 = vld [vmem:[%s2 + $0x3d8] sm:$0xff]
    %v148 = vld [vmem:[%s2 + $0x3e0] sm:$0xff]
    %v149 = vld [vmem:[%s2 + $0x3e8] sm:$0xff]
    %v150 = vld [vmem:[%s2 + $0x3f0] sm:$0xff]
    %v151 = vld [vmem:[%s2 + $0x3f8] sm:$0xff]
    %v152 = vld [vmem:[%s2 + $0x400] sm:$0xff]
    %v153 = vld [vmem:[%s2 + $0x408] sm:$0xff]
    %v154 = vld [vmem:[%s2 + $0x410] sm:$0xff]
    %v155 = vld [vmem:[%s2 + $0x418] sm:$0xff]
    %v156 = vld [vmem:[%s2 + $0x420] sm:$0xff]
    %v157 = vld [vmem:[%s2 + $0x428] sm:$0xff]
    %v158 = vld [vmem:[%s2 + $0x430] sm:$0xff]
    %v159 = vld [vmem:[%s2 + $0x438] sm:$0xff]
    %v160 = vld [vmem:[%s2 + $0x440] sm:$0xff]
    %v161 = vld [vmem:[%s2 + $0x448] sm:$0xff]
    %v162 = vld [vmem:[%s2 + $0x450] sm:$0xff]
    %v163 = vld [vmem:[%s2 + $0x458] sm:$0xff]
    %v164 = vld [vmem:[%s2 + $0x460] sm:$0xff]
    %v165 = vld [vmem:[%s2 + $0x468] sm:$0xff]
    %v166 = vld [vmem:[%s2 + $0x470] sm:$0xff]
    %v167 = vld [vmem:[%s2 + $0x478] sm:$0xff]
    %v168 = vld [vmem:[%s2 + $0x480] sm:$0xff]
    %v169 = vld [vmem:[%s2 + $0x488] sm:$0xff]
    %v170 = vld [vmem:[%s2 + $0x490] sm:$0xff]
    %v171 = vld [vmem:[%s2 + $0x498] sm:$0xff]
    %v172 = vld [vmem:[%s2 + $0x4a0] sm:$0xff]
    %v173 = vld [vmem:[%s2 + $0x4a8] sm:$0xff]
    %v174 = vld [vmem:[%s2 + $0x4b0] sm:$0xff]
    %v175 = vld [vmem:[%s2 + $0x4b8] sm:$0xff]
    %v176 = vld [vmem:[%s2 + $0x4c0] sm:$0xff]
    %v177 = vld [vmem:[%s2 + $0x4c8] sm:$0xff]
    %v178 = vld [vmem:[%s2 + $0x4d0] sm:$0xff]
    %v179 = vld [vmem:[%s2 + $0x4d8] sm:$0xff]
    %v180 = vld [vmem:[%s2 + $0x4e0] sm:$0xff]
    %v181 = vld [vmem:[%s2 + $0x4e8] sm:$0xff]
    %v182 = vld [vmem:[%s2 + $0x4f0] sm:$0xff]
    %v183 = vld [vmem:[%s2 + $0x4f8] sm:$0xff]
    %v184 = vld [vmem:[%s2 + $0x500] sm:$0xff]
    %v185 = vld [vmem:[%s2 + $0x508] sm:$0xff]
    %v186 = vld [vmem:[%s2 + $0x510] sm:$0xff]
    %v187 = vld [vmem:[%s2 + $0x518] sm:$0xff]
    %v188 = vld [vmem:[%s2 + $0x520] sm:$0xff]
    %v189 = vld [vmem:[%s2 + $0x528] sm:$0xff]
    %v190 = vld [vmem:[%s2 + $0x530] sm:$0xff]
    %v191 = vld [vmem:[%s2 + $0x538] sm:$0xff]
    %v192 = vld [vmem:[%s2 + $0x540] sm:$0xff]
    %v193 = vld [vmem:[%s2 + $0x548] sm:$0xff]
    %v194 = vld [vmem:[%s2 + $0x550] sm:$0xff]
    %v195 = vld [vmem:[%s2 + $0x558] sm:$0xff]
    %v196 = vld [vmem:[%s2 + $0x560] sm:$0xff]
    %v197 = vld [vmem:[%s2 + $0x568] sm:$0xff]
    %v198 = vld [vmem:[%s2 + $0x570] sm:$0xff]
    %v199 = vld [vmem:[%s2 + $0x578] sm:$0xff]
    %v200 = vld [vmem:[%s2 + $0x580] sm:$0xff]
    %v201 = vld [vmem:[%s2 + $0x588] sm:$0xff]
    %v202 = vld [vmem:[%s2 + $0x590] sm:$0xff]
    %v203 = vld [vmem:[%s2 + $0x598] sm:$0xff]
    %v204 = vld [vmem:[%s2 + $0x5a0] sm:$0xff]
    %v205 = vld [vmem:[%s2 + $0x5a8] sm:$0xff]
    %v206 = vld [vmem:[%s2 + $0x5b0] sm:$0xff]
    %v207 = vld [vmem:[%s2 + $0x5b8] sm:$0xff]
    %v208 = vld [vmem:[%s2 + $0x5c0] sm:$0xff]
    %v209 = vld [vmem:[%s2 + $0x5c8] sm:$0xff]
    %v210 = vld [vmem:[%s2 + $0x5d0] sm:$0xff]
    %v211 = vld [vmem:[%s2 + $0x5d8] sm:$0xff]
    %v212 = vld [vmem:[%s2 + $0x5e0] sm:$0xff]
    %v213 = vld [vmem:[%s2 + $0x5e8] sm:$0xff]
    %v214 = vld [vmem:[%s2 + $0x5f0] sm:$0xff]
    %v215 = vld [vmem:[%s2 + $0x5f8] sm:$0xff]
    %v216 = vld [vmem:[%s3] ss:$4 sm:$0xf]
    %v218 = vlaneseq
    %v219 = vshrl.u32 %v218, 7
    %v220 = vsub.s32 0, %v219
    %v221 = vrot.slane %v216, %v220
    %v222 = vlaneseq
    %v223 = vshrl.u32 %v222, 7
    %v224 = vsub.s32 1, %v223
    %v225 = vrot.slane %v216, %v224
    %v226 = vlaneseq
    %v227 = vshrl.u32 %v226, 7
    %v228 = vsub.s32 2, %v227
    %v229 = vrot.slane %v216, %v228
    %v230 = vlaneseq
    %v231 = vshrl.u32 %v230, 7
    %v232 = vsub.s32 3, %v231
    %v233 = vrot.slane %v216, %v232
    %v244 = vunpack.c.l.b16 %v18
    %v245 = vunpack.c.h.b16 %v18
    %v246 = vunpack.c.l.b16 %v19
    %v247 = vunpack.c.h.b16 %v19
    %v248 = vunpack.c.l.b16 %v20
    %v249 = vunpack.c.h.b16 %v20
    %v250 = vunpack.c.l.b16 %v21
    %v251 = vunpack.c.h.b16 %v21
    %v252 = vunpack.c.l.b16 %v22
    %v253 = vunpack.c.h.b16 %v22
    %v254 = vunpack.c.l.b16 %v23
    %v255 = vunpack.c.h.b16 %v23
    %v256 = vpack.c.b16 %v250, %v244
    %v257 = vpack.c.b16 %v251, %v245
    %v258 = vpack.c.b16 %v252, %v246
    %v259 = vpack.c.b16 %v253, %v247
    %v260 = vpack.c.b16 %v254, %v248
    %v261 = vpack.c.b16 %v255, %v249
    %v460 = vunpack.c.l.b16 %v24
    %v461 = vunpack.c.h.b16 %v24
    %v462 = vunpack.c.l.b16 %v25
    %v463 = vunpack.c.h.b16 %v25
    %v464 = vunpack.c.l.b16 %v26
    %v465 = vunpack.c.h.b16 %v26
    %v466 = vunpack.c.l.b16 %v27
    %v467 = vunpack.c.h.b16 %v27
    %v468 = vunpack.c.l.b16 %v28
    %v469 = vunpack.c.h.b16 %v28
    %v470 = vunpack.c.l.b16 %v29
    %v471 = vunpack.c.h.b16 %v29
    %v472 = vunpack.c.l.b16 %v30
    %v473 = vunpack.c.h.b16 %v30
    %v474 = vunpack.c.l.b16 %v31
    %v475 = vunpack.c.h.b16 %v31
    %v476 = vunpack.c.l.b16 %v32
    %v477 = vunpack.c.h.b16 %v32
    %v478 = vunpack.c.l.b16 %v33
    %v479 = vunpack.c.h.b16 %v33
    %v480 = vunpack.c.l.b16 %v34
    %v481 = vunpack.c.h.b16 %v34
    %v482 = vunpack.c.l.b16 %v35
    %v483 = vunpack.c.h.b16 %v35
    %v484 = vunpack.c.l.b16 %v36
    %v485 = vunpack.c.h.b16 %v36
    %v486 = vunpack.c.l.b16 %v37
    %v487 = vunpack.c.h.b16 %v37
    %v488 = vunpack.c.l.b16 %v38
    %v489 = vunpack.c.h.b16 %v38
    %v490 = vunpack.c.l.b16 %v39
    %v491 = vunpack.c.h.b16 %v39
    %v492 = vunpack.c.l.b16 %v40
    %v493 = vunpack.c.h.b16 %v40
    %v494 = vunpack.c.l.b16 %v41
    %v495 = vunpack.c.h.b16 %v41
    %v496 = vunpack.c.l.b16 %v42
    %v497 = vunpack.c.h.b16 %v42
    %v498 = vunpack.c.l.b16 %v43
    %v499 = vunpack.c.h.b16 %v43
    %v500 = vunpack.c.l.b16 %v44
    %v501 = vunpack.c.h.b16 %v44
    %v502 = vunpack.c.l.b16 %v45
    %v503 = vunpack.c.h.b16 %v45
    %v504 = vunpack.c.l.b16 %v46
    %v505 = vunpack.c.h.b16 %v46
    %v506 = vunpack.c.l.b16 %v47
    %v507 = vunpack.c.h.b16 %v47
    %v508 = vunpack.c.l.b16 %v48
    %v509 = vunpack.c.h.b16 %v48
    %v510 = vunpack.c.l.b16 %v49
    %v511 = vunpack.c.h.b16 %v49
    %v512 = vunpack.c.l.b16 %v50
    %v513 = vunpack.c.h.b16 %v50
    %v514 = vunpack.c.l.b16 %v51
    %v515 = vunpack.c.h.b16 %v51
    %v516 = vunpack.c.l.b16 %v52
    %v517 = vunpack.c.h.b16 %v52
    %v518 = vunpack.c.l.b16 %v53
    %v519 = vunpack.c.h.b16 %v53
    %v520 = vunpack.c.l.b16 %v54
    %v521 = vunpack.c.h.b16 %v54
    %v522 = vunpack.c.l.b16 %v55
    %v523 = vunpack.c.h.b16 %v55
    %v524 = vunpack.c.l.b16 %v56
    %v525 = vunpack.c.h.b16 %v56
    %v526 = vunpack.c.l.b16 %v57
    %v527 = vunpack.c.h.b16 %v57
    %v528 = vunpack.c.l.b16 %v58
    %v529 = vunpack.c.h.b16 %v58
    %v530 = vunpack.c.l.b16 %v59
    %v531 = vunpack.c.h.b16 %v59
    %v532 = vunpack.c.l.b16 %v60
    %v533 = vunpack.c.h.b16 %v60
    %v534 = vunpack.c.l.b16 %v61
    %v535 = vunpack.c.h.b16 %v61
    %v536 = vunpack.c.l.b16 %v62
    %v537 = vunpack.c.h.b16 %v62
    %v538 = vunpack.c.l.b16 %v63
    %v539 = vunpack.c.h.b16 %v63
    %v540 = vunpack.c.l.b16 %v64
    %v541 = vunpack.c.h.b16 %v64
    %v542 = vunpack.c.l.b16 %v65
    %v543 = vunpack.c.h.b16 %v65
    %v544 = vunpack.c.l.b16 %v66
    %v545 = vunpack.c.h.b16 %v66
    %v546 = vunpack.c.l.b16 %v67
    %v547 = vunpack.c.h.b16 %v67
    %v548 = vunpack.c.l.b16 %v68
    %v549 = vunpack.c.h.b16 %v68
    %v550 = vunpack.c.l.b16 %v69
    %v551 = vunpack.c.h.b16 %v69
    %v552 = vunpack.c.l.b16 %v70
    %v553 = vunpack.c.h.b16 %v70
    %v554 = vunpack.c.l.b16 %v71
    %v555 = vunpack.c.h.b16 %v71
    %v556 = vunpack.c.l.b16 %v72
    %v557 = vunpack.c.h.b16 %v72
    %v558 = vunpack.c.l.b16 %v73
    %v559 = vunpack.c.h.b16 %v73
    %v560 = vunpack.c.l.b16 %v74
    %v561 = vunpack.c.h.b16 %v74
    %v562 = vunpack.c.l.b16 %v75
    %v563 = vunpack.c.h.b16 %v75
    %v564 = vunpack.c.l.b16 %v76
    %v565 = vunpack.c.h.b16 %v76
    %v566 = vunpack.c.l.b16 %v77
    %v567 = vunpack.c.h.b16 %v77
    %v568 = vunpack.c.l.b16 %v78
    %v569 = vunpack.c.h.b16 %v78
    %v570 = vunpack.c.l.b16 %v79
    %v571 = vunpack.c.h.b16 %v79
    %v572 = vunpack.c.l.b16 %v80
    %v573 = vunpack.c.h.b16 %v80
    %v574 = vunpack.c.l.b16 %v81
    %v575 = vunpack.c.h.b16 %v81
    %v576 = vunpack.c.l.b16 %v82
    %v577 = vunpack.c.h.b16 %v82
    %v578 = vunpack.c.l.b16 %v83
    %v579 = vunpack.c.h.b16 %v83
    %v580 = vunpack.c.l.b16 %v84
    %v581 = vunpack.c.h.b16 %v84
    %v582 = vunpack.c.l.b16 %v85
    %v583 = vunpack.c.h.b16 %v85
    %v584 = vunpack.c.l.b16 %v86
    %v585 = vunpack.c.h.b16 %v86
    %v586 = vunpack.c.l.b16 %v87
    %v587 = vunpack.c.h.b16 %v87
    %v588 = vunpack.c.l.b16 %v88
    %v589 = vunpack.c.h.b16 %v88
    %v590 = vunpack.c.l.b16 %v89
    %v591 = vunpack.c.h.b16 %v89
    %v592 = vunpack.c.l.b16 %v90
    %v593 = vunpack.c.h.b16 %v90
    %v594 = vunpack.c.l.b16 %v91
    %v595 = vunpack.c.h.b16 %v91
    %v596 = vunpack.c.l.b16 %v92
    %v597 = vunpack.c.h.b16 %v92
    %v598 = vunpack.c.l.b16 %v93
    %v599 = vunpack.c.h.b16 %v93
    %v600 = vunpack.c.l.b16 %v94
    %v601 = vunpack.c.h.b16 %v94
    %v602 = vunpack.c.l.b16 %v95
    %v603 = vunpack.c.h.b16 %v95
    %v604 = vunpack.c.l.b16 %v96
    %v605 = vunpack.c.h.b16 %v96
    %v606 = vunpack.c.l.b16 %v97
    %v607 = vunpack.c.h.b16 %v97
    %v608 = vunpack.c.l.b16 %v98
    %v609 = vunpack.c.h.b16 %v98
    %v610 = vunpack.c.l.b16 %v99
    %v611 = vunpack.c.h.b16 %v99
    %v612 = vunpack.c.l.b16 %v100
    %v613 = vunpack.c.h.b16 %v100
    %v614 = vunpack.c.l.b16 %v101
    %v615 = vunpack.c.h.b16 %v101
    %v616 = vunpack.c.l.b16 %v102
    %v617 = vunpack.c.h.b16 %v102
    %v618 = vunpack.c.l.b16 %v103
    %v619 = vunpack.c.h.b16 %v103
    %v620 = vunpack.c.l.b16 %v104
    %v621 = vunpack.c.h.b16 %v104
    %v622 = vunpack.c.l.b16 %v105
    %v623 = vunpack.c.h.b16 %v105
    %v624 = vunpack.c.l.b16 %v106
    %v625 = vunpack.c.h.b16 %v106
    %v626 = vunpack.c.l.b16 %v107
    %v627 = vunpack.c.h.b16 %v107
    %v628 = vunpack.c.l.b16 %v108
    %v629 = vunpack.c.h.b16 %v108
    %v630 = vunpack.c.l.b16 %v109
    %v631 = vunpack.c.h.b16 %v109
    %v632 = vunpack.c.l.b16 %v110
    %v633 = vunpack.c.h.b16 %v110
    %v634 = vunpack.c.l.b16 %v111
    %v635 = vunpack.c.h.b16 %v111
    %v636 = vunpack.c.l.b16 %v112
    %v637 = vunpack.c.h.b16 %v112
    %v638 = vunpack.c.l.b16 %v113
    %v639 = vunpack.c.h.b16 %v113
    %v640 = vunpack.c.l.b16 %v114
    %v641 = vunpack.c.h.b16 %v114
    %v642 = vunpack.c.l.b16 %v115
    %v643 = vunpack.c.h.b16 %v115
    %v644 = vunpack.c.l.b16 %v116
    %v645 = vunpack.c.h.b16 %v116
    %v646 = vunpack.c.l.b16 %v117
    %v647 = vunpack.c.h.b16 %v117
    %v648 = vunpack.c.l.b16 %v118
    %v649 = vunpack.c.h.b16 %v118
    %v650 = vunpack.c.l.b16 %v119
    %v651 = vunpack.c.h.b16 %v119
    %v652 = vunpack.c.l.b16 %v120
    %v653 = vunpack.c.h.b16 %v120
    %v654 = vunpack.c.l.b16 %v121
    %v655 = vunpack.c.h.b16 %v121
    %v656 = vunpack.c.l.b16 %v122
    %v657 = vunpack.c.h.b16 %v122
    %v658 = vunpack.c.l.b16 %v123
    %v659 = vunpack.c.h.b16 %v123
    %v660 = vunpack.c.l.b16 %v124
    %v661 = vunpack.c.h.b16 %v124
    %v662 = vunpack.c.l.b16 %v125
    %v663 = vunpack.c.h.b16 %v125
    %v664 = vunpack.c.l.b16 %v126
    %v665 = vunpack.c.h.b16 %v126
    %v666 = vunpack.c.l.b16 %v127
    %v667 = vunpack.c.h.b16 %v127
    %v668 = vunpack.c.l.b16 %v128
    %v669 = vunpack.c.h.b16 %v128
    %v670 = vunpack.c.l.b16 %v129
    %v671 = vunpack.c.h.b16 %v129
    %v672 = vunpack.c.l.b16 %v130
    %v673 = vunpack.c.h.b16 %v130
    %v674 = vunpack.c.l.b16 %v131
    %v675 = vunpack.c.h.b16 %v131
    %v676 = vunpack.c.l.b16 %v132
    %v677 = vunpack.c.h.b16 %v132
    %v678 = vunpack.c.l.b16 %v133
    %v679 = vunpack.c.h.b16 %v133
    %v680 = vunpack.c.l.b16 %v134
    %v681 = vunpack.c.h.b16 %v134
    %v682 = vunpack.c.l.b16 %v135
    %v683 = vunpack.c.h.b16 %v135
    %v684 = vunpack.c.l.b16 %v136
    %v685 = vunpack.c.h.b16 %v136
    %v686 = vunpack.c.l.b16 %v137
    %v687 = vunpack.c.h.b16 %v137
    %v688 = vunpack.c.l.b16 %v138
    %v689 = vunpack.c.h.b16 %v138
    %v690 = vunpack.c.l.b16 %v139
    %v691 = vunpack.c.h.b16 %v139
    %v692 = vunpack.c.l.b16 %v140
    %v693 = vunpack.c.h.b16 %v140
    %v694 = vunpack.c.l.b16 %v141
    %v695 = vunpack.c.h.b16 %v141
    %v696 = vunpack.c.l.b16 %v142
    %v697 = vunpack.c.h.b16 %v142
    %v698 = vunpack.c.l.b16 %v143
    %v699 = vunpack.c.h.b16 %v143
    %v700 = vunpack.c.l.b16 %v144
    %v701 = vunpack.c.h.b16 %v144
    %v702 = vunpack.c.l.b16 %v145
    %v703 = vunpack.c.h.b16 %v145
    %v704 = vunpack.c.l.b16 %v146
    %v705 = vunpack.c.h.b16 %v146
    %v706 = vunpack.c.l.b16 %v147
    %v707 = vunpack.c.h.b16 %v147
    %v708 = vunpack.c.l.b16 %v148
    %v709 = vunpack.c.h.b16 %v148
    %v710 = vunpack.c.l.b16 %v149
    %v711 = vunpack.c.h.b16 %v149
    %v712 = vunpack.c.l.b16 %v150
    %v713 = vunpack.c.h.b16 %v150
    %v714 = vunpack.c.l.b16 %v151
    %v715 = vunpack.c.h.b16 %v151
    %v716 = vunpack.c.l.b16 %v152
    %v717 = vunpack.c.h.b16 %v152
    %v718 = vunpack.c.l.b16 %v153
    %v719 = vunpack.c.h.b16 %v153
    %v720 = vunpack.c.l.b16 %v154
    %v721 = vunpack.c.h.b16 %v154
    %v722 = vunpack.c.l.b16 %v155
    %v723 = vunpack.c.h.b16 %v155
    %v724 = vunpack.c.l.b16 %v156
    %v725 = vunpack.c.h.b16 %v156
    %v726 = vunpack.c.l.b16 %v157
    %v727 = vunpack.c.h.b16 %v157
    %v728 = vunpack.c.l.b16 %v158
    %v729 = vunpack.c.h.b16 %v158
    %v730 = vunpack.c.l.b16 %v159
    %v731 = vunpack.c.h.b16 %v159
    %v732 = vunpack.c.l.b16 %v160
    %v733 = vunpack.c.h.b16 %v160
    %v734 = vunpack.c.l.b16 %v161
    %v735 = vunpack.c.h.b16 %v161
    %v736 = vunpack.c.l.b16 %v162
    %v737 = vunpack.c.h.b16 %v162
    %v738 = vunpack.c.l.b16 %v163
    %v739 = vunpack.c.h.b16 %v163
    %v740 = vunpack.c.l.b16 %v164
    %v741 = vunpack.c.h.b16 %v164
    %v742 = vunpack.c.l.b16 %v165
    %v743 = vunpack.c.h.b16 %v165
    %v744 = vunpack.c.l.b16 %v166
    %v745 = vunpack.c.h.b16 %v166
    %v746 = vunpack.c.l.b16 %v167
    %v747 = vunpack.c.h.b16 %v167
    %v748 = vunpack.c.l.b16 %v168
    %v749 = vunpack.c.h.b16 %v168
    %v750 = vunpack.c.l.b16 %v169
    %v751 = vunpack.c.h.b16 %v169
    %v752 = vunpack.c.l.b16 %v170
    %v753 = vunpack.c.h.b16 %v170
    %v754 = vunpack.c.l.b16 %v171
    %v755 = vunpack.c.h.b16 %v171
    %v756 = vunpack.c.l.b16 %v172
    %v757 = vunpack.c.h.b16 %v172
    %v758 = vunpack.c.l.b16 %v173
    %v759 = vunpack.c.h.b16 %v173
    %v760 = vunpack.c.l.b16 %v174
    %v761 = vunpack.c.h.b16 %v174
    %v762 = vunpack.c.l.b16 %v175
    %v763 = vunpack.c.h.b16 %v175
    %v764 = vunpack.c.l.b16 %v176
    %v765 = vunpack.c.h.b16 %v176
    %v766 = vunpack.c.l.b16 %v177
    %v767 = vunpack.c.h.b16 %v177
    %v768 = vunpack.c.l.b16 %v178
    %v769 = vunpack.c.h.b16 %v178
    %v770 = vunpack.c.l.b16 %v179
    %v771 = vunpack.c.h.b16 %v179
    %v772 = vunpack.c.l.b16 %v180
    %v773 = vunpack.c.h.b16 %v180
    %v774 = vunpack.c.l.b16 %v181
    %v775 = vunpack.c.h.b16 %v181
    %v776 = vunpack.c.l.b16 %v182
    %v777 = vunpack.c.h.b16 %v182
    %v778 = vunpack.c.l.b16 %v183
    %v779 = vunpack.c.h.b16 %v183
    %v780 = vunpack.c.l.b16 %v184
    %v781 = vunpack.c.h.b16 %v184
    %v782 = vunpack.c.l.b16 %v185
    %v783 = vunpack.c.h.b16 %v185
    %v784 = vunpack.c.l.b16 %v186
    %v785 = vunpack.c.h.b16 %v186
    %v786 = vunpack.c.l.b16 %v187
    %v787 = vunpack.c.h.b16 %v187
    %v788 = vunpack.c.l.b16 %v188
    %v789 = vunpack.c.h.b16 %v188
    %v790 = vunpack.c.l.b16 %v189
    %v791 = vunpack.c.h.b16 %v189
    %v792 = vunpack.c.l.b16 %v190
    %v793 = vunpack.c.h.b16 %v190
    %v794 = vunpack.c.l.b16 %v191
    %v795 = vunpack.c.h.b16 %v191
    %v796 = vunpack.c.l.b16 %v192
    %v797 = vunpack.c.h.b16 %v192
    %v798 = vunpack.c.l.b16 %v193
    %v799 = vunpack.c.h.b16 %v193
    %v800 = vunpack.c.l.b16 %v194
    %v801 = vunpack.c.h.b16 %v194
    %v802 = vunpack.c.l.b16 %v195
    %v803 = vunpack.c.h.b16 %v195
    %v804 = vunpack.c.l.b16 %v196
    %v805 = vunpack.c.h.b16 %v196
    %v806 = vunpack.c.l.b16 %v197
    %v807 = vunpack.c.h.b16 %v197
    %v808 = vunpack.c.l.b16 %v198
    %v809 = vunpack.c.h.b16 %v198
    %v810 = vunpack.c.l.b16 %v199
    %v811 = vunpack.c.h.b16 %v199
    %v812 = vunpack.c.l.b16 %v200
    %v813 = vunpack.c.h.b16 %v200
    %v814 = vunpack.c.l.b16 %v201
    %v815 = vunpack.c.h.b16 %v201
    %v816 = vunpack.c.l.b16 %v202
    %v817 = vunpack.c.h.b16 %v202
    %v818 = vunpack.c.l.b16 %v203
    %v819 = vunpack.c.h.b16 %v203
    %v820 = vunpack.c.l.b16 %v204
    %v821 = vunpack.c.h.b16 %v204
    %v822 = vunpack.c.l.b16 %v205
    %v823 = vunpack.c.h.b16 %v205
    %v824 = vunpack.c.l.b16 %v206
    %v825 = vunpack.c.h.b16 %v206
    %v826 = vunpack.c.l.b16 %v207
    %v827 = vunpack.c.h.b16 %v207
    %v828 = vunpack.c.l.b16 %v208
    %v829 = vunpack.c.h.b16 %v208
    %v830 = vunpack.c.l.b16 %v209
    %v831 = vunpack.c.h.b16 %v209
    %v832 = vunpack.c.l.b16 %v210
    %v833 = vunpack.c.h.b16 %v210
    %v834 = vunpack.c.l.b16 %v211
    %v835 = vunpack.c.h.b16 %v211
    %v836 = vunpack.c.l.b16 %v212
    %v837 = vunpack.c.h.b16 %v212
    %v838 = vunpack.c.l.b16 %v213
    %v839 = vunpack.c.h.b16 %v213
    %v840 = vunpack.c.l.b16 %v214
    %v841 = vunpack.c.h.b16 %v214
    %v842 = vunpack.c.l.b16 %v215
    %v843 = vunpack.c.h.b16 %v215
    %v844 = vpack.c.b16 %v464, %v460
    %v845 = vpack.c.b16 %v465, %v461
    %v846 = vpack.c.b16 %v466, %v462
    %v847 = vpack.c.b16 %v467, %v463
    %v848 = vpack.c.b16 %v472, %v468
    %v849 = vpack.c.b16 %v473, %v469
    %v850 = vpack.c.b16 %v474, %v470
    %v851 = vpack.c.b16 %v475, %v471
    %v852 = vpack.c.b16 %v480, %v476
    %v853 = vpack.c.b16 %v481, %v477
    %v854 = vpack.c.b16 %v482, %v478
    %v855 = vpack.c.b16 %v483, %v479
    %v856 = vpack.c.b16 %v488, %v484
    %v857 = vpack.c.b16 %v489, %v485
    %v858 = vpack.c.b16 %v490, %v486
    %v859 = vpack.c.b16 %v491, %v487
    %v860 = vpack.c.b16 %v496, %v492
    %v861 = vpack.c.b16 %v497, %v493
    %v862 = vpack.c.b16 %v498, %v494
    %v863 = vpack.c.b16 %v499, %v495
    %v864 = vpack.c.b16 %v504, %v500
    %v865 = vpack.c.b16 %v505, %v501
    %v866 = vpack.c.b16 %v506, %v502
    %v867 = vpack.c.b16 %v507, %v503
    %v868 = vpack.c.b16 %v512, %v508
    %v869 = vpack.c.b16 %v513, %v509
    %v870 = vpack.c.b16 %v514, %v510
    %v871 = vpack.c.b16 %v515, %v511
    %v872 = vpack.c.b16 %v520, %v516
    %v873 = vpack.c.b16 %v521, %v517
    %v874 = vpack.c.b16 %v522, %v518
    %v875 = vpack.c.b16 %v523, %v519
    %v876 = vpack.c.b16 %v528, %v524
    %v877 = vpack.c.b16 %v529, %v525
    %v878 = vpack.c.b16 %v530, %v526
    %v879 = vpack.c.b16 %v531, %v527
    %v880 = vpack.c.b16 %v536, %v532
    %v881 = vpack.c.b16 %v537, %v533
    %v882 = vpack.c.b16 %v538, %v534
    %v883 = vpack.c.b16 %v539, %v535
    %v884 = vpack.c.b16 %v544, %v540
    %v885 = vpack.c.b16 %v545, %v541
    %v886 = vpack.c.b16 %v546, %v542
    %v887 = vpack.c.b16 %v547, %v543
    %v888 = vpack.c.b16 %v552, %v548
    %v889 = vpack.c.b16 %v553, %v549
    %v890 = vpack.c.b16 %v554, %v550
    %v891 = vpack.c.b16 %v555, %v551
    %v892 = vpack.c.b16 %v560, %v556
    %v893 = vpack.c.b16 %v561, %v557
    %v894 = vpack.c.b16 %v562, %v558
    %v895 = vpack.c.b16 %v563, %v559
    %v896 = vpack.c.b16 %v568, %v564
    %v897 = vpack.c.b16 %v569, %v565
    %v898 = vpack.c.b16 %v570, %v566
    %v899 = vpack.c.b16 %v571, %v567
    %v900 = vpack.c.b16 %v576, %v572
    %v901 = vpack.c.b16 %v577, %v573
    %v902 = vpack.c.b16 %v578, %v574
    %v903 = vpack.c.b16 %v579, %v575
    %v904 = vpack.c.b16 %v584, %v580
    %v905 = vpack.c.b16 %v585, %v581
    %v906 = vpack.c.b16 %v586, %v582
    %v907 = vpack.c.b16 %v587, %v583
    %v908 = vpack.c.b16 %v592, %v588
    %v909 = vpack.c.b16 %v593, %v589
    %v910 = vpack.c.b16 %v594, %v590
    %v911 = vpack.c.b16 %v595, %v591
    %v912 = vpack.c.b16 %v600, %v596
    %v913 = vpack.c.b16 %v601, %v597
    %v914 = vpack.c.b16 %v602, %v598
    %v915 = vpack.c.b16 %v603, %v599
    %v916 = vpack.c.b16 %v608, %v604
    %v917 = vpack.c.b16 %v609, %v605
    %v918 = vpack.c.b16 %v610, %v606
    %v919 = vpack.c.b16 %v611, %v607
    %v920 = vpack.c.b16 %v616, %v612
    %v921 = vpack.c.b16 %v617, %v613
    %v922 = vpack.c.b16 %v618, %v614
    %v923 = vpack.c.b16 %v619, %v615
    %v924 = vpack.c.b16 %v624, %v620
    %v925 = vpack.c.b16 %v625, %v621
    %v926 = vpack.c.b16 %v626, %v622
    %v927 = vpack.c.b16 %v627, %v623
    %v928 = vpack.c.b16 %v632, %v628
    %v929 = vpack.c.b16 %v633, %v629
    %v930 = vpack.c.b16 %v634, %v630
    %v931 = vpack.c.b16 %v635, %v631
    %v932 = vpack.c.b16 %v640, %v636
    %v933 = vpack.c.b16 %v641, %v637
    %v934 = vpack.c.b16 %v642, %v638
    %v935 = vpack.c.b16 %v643, %v639
    %v936 = vpack.c.b16 %v648, %v644
    %v937 = vpack.c.b16 %v649, %v645
    %v938 = vpack.c.b16 %v650, %v646
    %v939 = vpack.c.b16 %v651, %v647
    %v940 = vpack.c.b16 %v656, %v652
    %v941 = vpack.c.b16 %v657, %v653
    %v942 = vpack.c.b16 %v658, %v654
    %v943 = vpack.c.b16 %v659, %v655
    %v944 = vpack.c.b16 %v664, %v660
    %v945 = vpack.c.b16 %v665, %v661
    %v946 = vpack.c.b16 %v666, %v662
    %v947 = vpack.c.b16 %v667, %v663
    %v948 = vpack.c.b16 %v672, %v668
    %v949 = vpack.c.b16 %v673, %v669
    %v950 = vpack.c.b16 %v674, %v670
    %v951 = vpack.c.b16 %v675, %v671
    %v952 = vpack.c.b16 %v680, %v676
    %v953 = vpack.c.b16 %v681, %v677
    %v954 = vpack.c.b16 %v682, %v678
    %v955 = vpack.c.b16 %v683, %v679
    %v956 = vpack.c.b16 %v688, %v684
    %v957 = vpack.c.b16 %v689, %v685
    %v958 = vpack.c.b16 %v690, %v686
    %v959 = vpack.c.b16 %v691, %v687
    %v960 = vpack.c.b16 %v696, %v692
    %v961 = vpack.c.b16 %v697, %v693
    %v962 = vpack.c.b16 %v698, %v694
    %v963 = vpack.c.b16 %v699, %v695
    %v964 = vpack.c.b16 %v704, %v700
    %v965 = vpack.c.b16 %v705, %v701
    %v966 = vpack.c.b16 %v706, %v702
    %v967 = vpack.c.b16 %v707, %v703
    %v968 = vpack.c.b16 %v712, %v708
    %v969 = vpack.c.b16 %v713, %v709
    %v970 = vpack.c.b16 %v714, %v710
    %v971 = vpack.c.b16 %v715, %v711
    %v972 = vpack.c.b16 %v720, %v716
    %v973 = vpack.c.b16 %v721, %v717
    %v974 = vpack.c.b16 %v722, %v718
    %v975 = vpack.c.b16 %v723, %v719
    %v976 = vpack.c.b16 %v728, %v724
    %v977 = vpack.c.b16 %v729, %v725
    %v978 = vpack.c.b16 %v730, %v726
    %v979 = vpack.c.b16 %v731, %v727
    %v980 = vpack.c.b16 %v736, %v732
    %v981 = vpack.c.b16 %v737, %v733
    %v982 = vpack.c.b16 %v738, %v734
    %v983 = vpack.c.b16 %v739, %v735
    %v984 = vpack.c.b16 %v744, %v740
    %v985 = vpack.c.b16 %v745, %v741
    %v986 = vpack.c.b16 %v746, %v742
    %v987 = vpack.c.b16 %v747, %v743
    %v988 = vpack.c.b16 %v752, %v748
    %v989 = vpack.c.b16 %v753, %v749
    %v990 = vpack.c.b16 %v754, %v750
    %v991 = vpack.c.b16 %v755, %v751
    %v992 = vpack.c.b16 %v760, %v756
    %v993 = vpack.c.b16 %v761, %v757
    %v994 = vpack.c.b16 %v762, %v758
    %v995 = vpack.c.b16 %v763, %v759
    %v996 = vpack.c.b16 %v768, %v764
    %v997 = vpack.c.b16 %v769, %v765
    %v998 = vpack.c.b16 %v770, %v766
    %v999 = vpack.c.b16 %v771, %v767
    %v1000 = vpack.c.b16 %v776, %v772
    %v1001 = vpack.c.b16 %v777, %v773
    %v1002 = vpack.c.b16 %v778, %v774
    %v1003 = vpack.c.b16 %v779, %v775
    %v1004 = vpack.c.b16 %v784, %v780
    %v1005 = vpack.c.b16 %v785, %v781
    %v1006 = vpack.c.b16 %v786, %v782
    %v1007 = vpack.c.b16 %v787, %v783
    %v1008 = vpack.c.b16 %v792, %v788
    %v1009 = vpack.c.b16 %v793, %v789
    %v1010 = vpack.c.b16 %v794, %v790
    %v1011 = vpack.c.b16 %v795, %v791
    %v1012 = vpack.c.b16 %v800, %v796
    %v1013 = vpack.c.b16 %v801, %v797
    %v1014 = vpack.c.b16 %v802, %v798
    %v1015 = vpack.c.b16 %v803, %v799
    %v1016 = vpack.c.b16 %v808, %v804
    %v1017 = vpack.c.b16 %v809, %v805
    %v1018 = vpack.c.b16 %v810, %v806
    %v1019 = vpack.c.b16 %v811, %v807
    %v1020 = vpack.c.b16 %v816, %v812
    %v1021 = vpack.c.b16 %v817, %v813
    %v1022 = vpack.c.b16 %v818, %v814
    %v1023 = vpack.c.b16 %v819, %v815
    %v1024 = vpack.c.b16 %v824, %v820
    %v1025 = vpack.c.b16 %v825, %v821
    %v1026 = vpack.c.b16 %v826, %v822
    %v1027 = vpack.c.b16 %v827, %v823
    %v1028 = vpack.c.b16 %v832, %v828
    %v1029 = vpack.c.b16 %v833, %v829
    %v1030 = vpack.c.b16 %v834, %v830
    %v1031 = vpack.c.b16 %v835, %v831
    %v1032 = vpack.c.b16 %v840, %v836
    %v1033 = vpack.c.b16 %v841, %v837
    %v1034 = vpack.c.b16 %v842, %v838
    %v1035 = vpack.c.b16 %v843, %v839
    %1228 = vmatprep.subr.bf16.mxu0 %v873
    %1229 = vmatpush1.bf16.msra.mxu0 %v872
    %1230 = vmatprep.subr.bf16.mxu0 %v869
    %1231 = vmatpush1.bf16.msra.mxu0 %v868
    %1232 = vmatprep.subr.bf16.mxu0 %v865
    %1233 = vmatpush1.bf16.msra.mxu0 %v864
    %1234 = vmatprep.subr.bf16.mxu0 %v861
    %1235 = vmatpush1.bf16.msra.mxu0 %v860
    %1236 = vmatprep.subr.bf16.mxu0 %v857
    %1237 = vmatpush1.bf16.msra.mxu0 %v856
    %1238 = vmatprep.subr.bf16.mxu0 %v853
    %1239 = vmatpush1.bf16.msra.mxu0 %v852
    %1240 = vmatprep.subr.bf16.mxu0 %v849
    %1241 = vmatpush1.bf16.msra.mxu0 %v848
    %1242 = vmatprep.subr.bf16.mxu0 %v845
    %1243 = vmatpush1.bf16.msra.mxu0 %v844
    %1244 = vmatprep.subr.bf16.mxu0 %v905
    %1245 = vmatpush2.bf16.msra.mxu0 %v904
    %1246 = vmatprep.subr.bf16.mxu0 %v901
    %1247 = vmatpush2.bf16.msra.mxu0 %v900
    %1248 = vmatprep.subr.bf16.mxu0 %v897
    %1249 = vmatpush2.bf16.msra.mxu0 %v896
    %1250 = vmatprep.subr.bf16.mxu0 %v893
    %1251 = vmatpush2.bf16.msra.mxu0 %v892
    %1252 = vmatprep.subr.bf16.mxu0 %v889
    %1253 = vmatpush2.bf16.msra.mxu0 %v888
    %1254 = vmatprep.subr.bf16.mxu0 %v885
    %1255 = vmatpush2.bf16.msra.mxu0 %v884
    %1256 = vmatprep.subr.bf16.mxu0 %v881
    %1257 = vmatpush2.bf16.msra.mxu0 %v880
    %1258 = vmatprep.subr.bf16.mxu0 %v877
    %1259 = vmatpush2.bf16.msra.mxu0 %v876
    %1260 = vmatprep.mubr.bf16.mxu0 %v257
    %1261 = vmatmul.mubr.bf16.gmra.mxu0 %v256
    %v1262 = vpop.f32.mrf.mxu0
    %v1263 = vadd.f32 %v221, %v1262
    %v1264 = vpop.f32.mrf.mxu0
    %v1265 = vadd.f32 %v225, %v1264
    %v1266 = vpop.f32.mrf.mxu0
    %v1267 = vadd.f32 %v221, %v1266
    %v1268 = vpop.f32.mrf.mxu0
    %v1269 = vadd.f32 %v225, %v1268
    %1270 = vdwg.mxu0
    %1271 = vmatprep.subr.bf16.mxu0 %v937
    %1272 = vmatpush1.bf16.msra.mxu0 %v936
    %1273 = vmatprep.subr.bf16.mxu0 %v933
    %1274 = vmatpush1.bf16.msra.mxu0 %v932
    %1275 = vmatprep.subr.bf16.mxu0 %v929
    %1276 = vmatpush1.bf16.msra.mxu0 %v928
    %1277 = vmatprep.subr.bf16.mxu0 %v925
    %1278 = vmatpush1.bf16.msra.mxu0 %v924
    %1279 = vmatprep.subr.bf16.mxu0 %v921
    %1280 = vmatpush1.bf16.msra.mxu0 %v920
    %1281 = vmatprep.subr.bf16.mxu0 %v917
    %1282 = vmatpush1.bf16.msra.mxu0 %v916
    %1283 = vmatprep.subr.bf16.mxu0 %v913
    %1284 = vmatpush1.bf16.msra.mxu0 %v912
    %1285 = vmatprep.subr.bf16.mxu0 %v909
    %1286 = vmatpush1.bf16.msra.mxu0 %v908
    %1287 = vmatprep.subr.bf16.mxu0 %v969
    %1288 = vmatpush2.bf16.msra.mxu0 %v968
    %1289 = vmatprep.subr.bf16.mxu0 %v965
    %1290 = vmatpush2.bf16.msra.mxu0 %v964
    %1291 = vmatprep.subr.bf16.mxu0 %v961
    %1292 = vmatpush2.bf16.msra.mxu0 %v960
    %1293 = vmatprep.subr.bf16.mxu0 %v957
    %1294 = vmatpush2.bf16.msra.mxu0 %v956
    %1295 = vmatprep.subr.bf16.mxu0 %v953
    %1296 = vmatpush2.bf16.msra.mxu0 %v952
    %1297 = vmatprep.subr.bf16.mxu0 %v949
    %1298 = vmatpush2.bf16.msra.mxu0 %v948
    %1299 = vmatprep.subr.bf16.mxu0 %v945
    %1300 = vmatpush2.bf16.msra.mxu0 %v944
    %1301 = vmatprep.subr.bf16.mxu0 %v941
    %1302 = vmatpush2.bf16.msra.mxu0 %v940
    %1303 = vmatprep.mubr.bf16.mxu0 %v259
    %1304 = vmatmul.mubr.bf16.gmra.mxu0 %v258
    %v1305 = vpop.f32.mrf.mxu0
    %v1306 = vadd.f32 %v1263, %v1305
    %v1307 = vpop.f32.mrf.mxu0
    %v1308 = vadd.f32 %v1265, %v1307
    %v1309 = vpop.f32.mrf.mxu0
    %v1310 = vadd.f32 %v1267, %v1309
    %v1311 = vpop.f32.mrf.mxu0
    %v1312 = vadd.f32 %v1269, %v1311
    %1313 = vdwg.mxu0
    %1314 = vmatprep.subr.bf16.mxu0 %v1001
    %1315 = vmatpush1.bf16.msra.mxu0 %v1000
    %1316 = vmatprep.subr.bf16.mxu0 %v997
    %1317 = vmatpush1.bf16.msra.mxu0 %v996
    %1318 = vmatprep.subr.bf16.mxu0 %v993
    %1319 = vmatpush1.bf16.msra.mxu0 %v992
    %1320 = vmatprep.subr.bf16.mxu0 %v989
    %1321 = vmatpush1.bf16.msra.mxu0 %v988
    %1322 = vmatprep.subr.bf16.mxu0 %v985
    %1323 = vmatpush1.bf16.msra.mxu0 %v984
    %1324 = vmatprep.subr.bf16.mxu0 %v981
    %1325 = vmatpush1.bf16.msra.mxu0 %v980
    %1326 = vmatprep.subr.bf16.mxu0 %v977
    %1327 = vmatpush1.bf16.msra.mxu0 %v976
    %1328 = vmatprep.subr.bf16.mxu0 %v973
    %1329 = vmatpush1.bf16.msra.mxu0 %v972
    %1330 = vmatprep.subr.bf16.mxu0 %v1033
    %1331 = vmatpush2.bf16.msra.mxu0 %v1032
    %1332 = vmatprep.subr.bf16.mxu0 %v1029
    %1333 = vmatpush2.bf16.msra.mxu0 %v1028
    %1334 = vmatprep.subr.bf16.mxu0 %v1025
    %1335 = vmatpush2.bf16.msra.mxu0 %v1024
    %1336 = vmatprep.subr.bf16.mxu0 %v1021
    %1337 = vmatpush2.bf16.msra.mxu0 %v1020
    %1338 = vmatprep.subr.bf16.mxu0 %v1017
    %1339 = vmatpush2.bf16.msra.mxu0 %v1016
    %1340 = vmatprep.subr.bf16.mxu0 %v1013
    %1341 = vmatpush2.bf16.msra.mxu0 %v1012
    %1342 = vmatprep.subr.bf16.mxu0 %v1009
    %1343 = vmatpush2.bf16.msra.mxu0 %v1008
    %1344 = vmatprep.subr.bf16.mxu0 %v1005
    %1345 = vmatpush2.bf16.msra.mxu0 %v1004
    %1346 = vmatprep.mubr.bf16.mxu0 %v261
    %1347 = vmatmul.mubr.bf16.gmra.mxu0 %v260
    %v1348 = vpop.f32.mrf.mxu0
    %v1349 = vadd.f32 %v1306, %v1348
    %v1350 = vpop.f32.mrf.mxu0
    %v1351 = vadd.f32 %v1308, %v1350
    %v1352 = vpop.f32.mrf.mxu0
    %v1353 = vadd.f32 %v1310, %v1352
    %v1354 = vpop.f32.mrf.mxu0
    %v1355 = vadd.f32 %v1312, %v1354
    %1356 = vdwg.mxu0
    %1357 = vmatprep.subr.bf16.mxu0 %v875
    %1358 = vmatpush1.bf16.msra.mxu0 %v874
    %1359 = vmatprep.subr.bf16.mxu0 %v871
    %1360 = vmatpush1.bf16.msra.mxu0 %v870
    %1361 = vmatprep.subr.bf16.mxu0 %v867
    %1362 = vmatpush1.bf16.msra.mxu0 %v866
    %1363 = vmatprep.subr.bf16.mxu0 %v863
    %1364 = vmatpush1.bf16.msra.mxu0 %v862
    %1365 = vmatprep.subr.bf16.mxu0 %v859
    %1366 = vmatpush1.bf16.msra.mxu0 %v858
    %1367 = vmatprep.subr.bf16.mxu0 %v855
    %1368 = vmatpush1.bf16.msra.mxu0 %v854
    %1369 = vmatprep.subr.bf16.mxu0 %v851
    %1370 = vmatpush1.bf16.msra.mxu0 %v850
    %1371 = vmatprep.subr.bf16.mxu0 %v847
    %1372 = vmatpush1.bf16.msra.mxu0 %v846
    %1373 = vmatprep.subr.bf16.mxu0 %v907
    %1374 = vmatpush2.bf16.msra.mxu0 %v906
    %1375 = vmatprep.subr.bf16.mxu0 %v903
    %1376 = vmatpush2.bf16.msra.mxu0 %v902
    %1377 = vmatprep.subr.bf16.mxu0 %v899
    %1378 = vmatpush2.bf16.msra.mxu0 %v898
    %1379 = vmatprep.subr.bf16.mxu0 %v895
    %1380 = vmatpush2.bf16.msra.mxu0 %v894
    %1381 = vmatprep.subr.bf16.mxu0 %v891
    %1382 = vmatpush2.bf16.msra.mxu0 %v890
    %1383 = vmatprep.subr.bf16.mxu0 %v887
    %1384 = vmatpush2.bf16.msra.mxu0 %v886
    %1385 = vmatprep.subr.bf16.mxu0 %v883
    %1386 = vmatpush2.bf16.msra.mxu0 %v882
    %1387 = vmatprep.subr.bf16.mxu0 %v879
    %1388 = vmatpush2.bf16.msra.mxu0 %v878
    %1389 = vmatprep.mubr.bf16.mxu0 %v257
    %1390 = vmatmul.mubr.bf16.gmra.mxu0 %v256
    %v1391 = vpop.f32.mrf.mxu0
    %v1392 = vadd.f32 %v229, %v1391
    %v1393 = vpop.f32.mrf.mxu0
    %v1394 = vadd.f32 %v233, %v1393
    %v1395 = vpop.f32.mrf.mxu0
    %v1396 = vadd.f32 %v229, %v1395
    %v1397 = vpop.f32.mrf.mxu0
    %v1398 = vadd.f32 %v233, %v1397
    %1399 = vdwg.mxu0
    %1400 = vmatprep.subr.bf16.mxu0 %v939
    %1401 = vmatpush1.bf16.msra.mxu0 %v938
    %1402 = vmatprep.subr.bf16.mxu0 %v935
    %1403 = vmatpush1.bf16.msra.mxu0 %v934
    %1404 = vmatprep.subr.bf16.mxu0 %v931
    %1405 = vmatpush1.bf16.msra.mxu0 %v930
    %1406 = vmatprep.subr.bf16.mxu0 %v927
    %1407 = vmatpush1.bf16.msra.mxu0 %v926
    %1408 = vmatprep.subr.bf16.mxu0 %v923
    %1409 = vmatpush1.bf16.msra.mxu0 %v922
    %1410 = vmatprep.subr.bf16.mxu0 %v919
    %1411 = vmatpush1.bf16.msra.mxu0 %v918
    %1412 = vmatprep.subr.bf16.mxu0 %v915
    %1413 = vmatpush1.bf16.msra.mxu0 %v914
    %1414 = vmatprep.subr.bf16.mxu0 %v911
    %1415 = vmatpush1.bf16.msra.mxu0 %v910
    %1416 = vmatprep.subr.bf16.mxu0 %v971
    %1417 = vmatpush2.bf16.msra.mxu0 %v970
    %1418 = vmatprep.subr.bf16.mxu0 %v967
    %1419 = vmatpush2.bf16.msra.mxu0 %v966
    %1420 = vmatprep.subr.bf16.mxu0 %v963
    %1421 = vmatpush2.bf16.msra.mxu0 %v962
    %1422 = vmatprep.subr.bf16.mxu0 %v959
    %1423 = vmatpush2.bf16.msra.mxu0 %v958
    %1424 = vmatprep.subr.bf16.mxu0 %v955
    %1425 = vmatpush2.bf16.msra.mxu0 %v954
    %1426 = vmatprep.subr.bf16.mxu0 %v951
    %1427 = vmatpush2.bf16.msra.mxu0 %v950
    %1428 = vmatprep.subr.bf16.mxu0 %v947
    %1429 = vmatpush2.bf16.msra.mxu0 %v946
    %1430 = vmatprep.subr.bf16.mxu0 %v943
    %1431 = vmatpush2.bf16.msra.mxu0 %v942
    %1432 = vmatprep.mubr.bf16.mxu0 %v259
    %1433 = vmatmul.mubr.bf16.gmra.mxu0 %v258
    %v1434 = vpop.f32.mrf.mxu0
    %v1435 = vadd.f32 %v1392, %v1434
    %v1436 = vpop.f32.mrf.mxu0
    %v1437 = vadd.f32 %v1394, %v1436
    %v1438 = vpop.f32.mrf.mxu0
    %v1439 = vadd.f32 %v1396, %v1438
    %v1440 = vpop.f32.mrf.mxu0
    %v1441 = vadd.f32 %v1398, %v1440
    %1442 = vdwg.mxu0
    %1443 = vmatprep.subr.bf16.mxu0 %v1003
    %1444 = vmatpush1.bf16.msra.mxu0 %v1002
    %1445 = vmatprep.subr.bf16.mxu0 %v999
    %1446 = vmatpush1.bf16.msra.mxu0 %v998
    %1447 = vmatprep.subr.bf16.mxu0 %v995
    %1448 = vmatpush1.bf16.msra.mxu0 %v994
    %1449 = vmatprep.subr.bf16.mxu0 %v991
    %1450 = vmatpush1.bf16.msra.mxu0 %v990
    %1451 = vmatprep.subr.bf16.mxu0 %v987
    %1452 = vmatpush1.bf16.msra.mxu0 %v986
    %1453 = vmatprep.subr.bf16.mxu0 %v983
    %1454 = vmatpush1.bf16.msra.mxu0 %v982
    %1455 = vmatprep.subr.bf16.mxu0 %v979
    %1456 = vmatpush1.bf16.msra.mxu0 %v978
    %1457 = vmatprep.subr.bf16.mxu0 %v975
    %1458 = vmatpush1.bf16.msra.mxu0 %v974
    %1459 = vmatprep.subr.bf16.mxu0 %v1035
    %1460 = vmatpush2.bf16.msra.mxu0 %v1034
    %1461 = vmatprep.subr.bf16.mxu0 %v1031
    %1462 = vmatpush2.bf16.msra.mxu0 %v1030
    %1463 = vmatprep.subr.bf16.mxu0 %v1027
    %1464 = vmatpush2.bf16.msra.mxu0 %v1026
    %1465 = vmatprep.subr.bf16.mxu0 %v1023
    %1466 = vmatpush2.bf16.msra.mxu0 %v1022
    %1467 = vmatprep.subr.bf16.mxu0 %v1019
    %1468 = vmatpush2.bf16.msra.mxu0 %v1018
    %1469 = vmatprep.subr.bf16.mxu0 %v1015
    %1470 = vmatpush2.bf16.msra.mxu0 %v1014
    %1471 = vmatprep.subr.bf16.mxu0 %v1011
    %1472 = vmatpush2.bf16.msra.mxu0 %v1010
    %1473 = vmatprep.subr.bf16.mxu0 %v1007
    %1474 = vmatpush2.bf16.msra.mxu0 %v1006
    %1475 = vmatprep.mubr.bf16.mxu0 %v261
    %1476 = vmatmul.mubr.bf16.gmra.mxu0 %v260
    %v1477 = vpop.f32.mrf.mxu0
    %v1478 = vadd.f32 %v1435, %v1477
    %v1479 = vpop.f32.mrf.mxu0
    %v1480 = vadd.f32 %v1437, %v1479
    %v1481 = vpop.f32.mrf.mxu0
    %v1482 = vadd.f32 %v1439, %v1481
    %v1483 = vpop.f32.mrf.mxu0
    %v1484 = vadd.f32 %v1441, %v1483
    %1485 = vdwg.mxu0
    %v1486 = vld [vmem:[%s1] sm:$0x3]
    %v1487 = vld [vmem:[%s1 + $0x2] sm:$0x3]
    %v1488 = vunpack.c.0.s8 %v1486
    %v1489 = vunpack.c.0.s8 %v1487
    %v1490 = vcvt.s32.f32 %v1488
    %v1491 = vcvt.s32.f32 %v1489
    %vm1492 = vcmp.ne.f32.partialorder %v1490, 0.0
    %vm1493 = vcmp.ne.f32.partialorder %v1491, 0.0
    %s1494 = scalar_lea.vmem %s3, 1
    %v1495 = vld [vmem:[%s1494] ss:$4 sm:$0xf]
    %v1496 = vsel %vm1492, 1, 0
    %v1497 = vsel %vm1493, 1, 0
    %1498 = vset.pattern.permute.xlu0 0
    %1499 = vperm.xlu0 %1498, %v1496
    %v1500 = vpop.permute.xlu0 %1499
    %1501 = vset.pattern.permute.xlu0 0
    %1502 = vperm.xlu0 %1501, %v1497
    %v1503 = vpop.permute.xlu0 %1502
    %vm1504 = vcmp.eq.s32.totalorder %v1500, 1
    %vm1505 = vcmp.eq.s32.totalorder %v1503, 1
    %v1507 = vlaneseq
    %v1508 = vshrl.u32 %v1507, 7
    %v1509 = vsub.s32 0, %v1508
    %v1510 = vrot.slane %v1495, %v1509
    %v1511 = vlaneseq
    %v1512 = vshrl.u32 %v1511, 7
    %v1513 = vsub.s32 1, %v1512
    %v1514 = vrot.slane %v1495, %v1513
    %v1515 = vlaneseq
    %v1516 = vshrl.u32 %v1515, 7
    %v1517 = vsub.s32 2, %v1516
    %v1518 = vrot.slane %v1495, %v1517
    %v1519 = vlaneseq
    %v1520 = vshrl.u32 %v1519, 7
    %v1521 = vsub.s32 3, %v1520
    %v1522 = vrot.slane %v1495, %v1521
    %v1527 = vsel %vm1504, %v1510, %v1349
    %v1528 = vsel %vm1504, %v1514, %v1351
    %v1529 = vsel %vm1504, %v1518, %v1478
    %v1530 = vsel %vm1504, %v1522, %v1480
    %v1531 = vsel %vm1505, %v1510, %v1353
    %v1532 = vsel %vm1505, %v1514, %v1355
    %v1533 = vsel %vm1505, %v1518, %v1482
    %v1534 = vsel %vm1505, %v1522, %v1484
    %v1535 = vadd.f32 %v1527, %v1528
    %v1536 = vadd.f32 %v1535, %v1529
    %v1537 = vadd.f32 %v1536, %v1530
    %1538 = vadd.xlane.f32.xlu0 %v1537
    %v1539 = vpop.xlane.xlu0 %1538
    %v1540 = vadd.f32 %v1531, %v1532
    %v1541 = vadd.f32 %v1540, %v1533
    %v1542 = vadd.f32 %v1541, %v1534
    %1543 = vadd.xlane.f32.xlu0 %v1542
    %v1544 = vpop.xlane.xlu0 %1543
    %v1545 = vrcp.pop 512.0
    %v1546 = vmul.f32 %v1539, %v1545
    %v1547 = vmul.f32 %v1544, %v1545
    %v1548 = vsub.f32 %v1527, %v1546
    %v1549 = vsub.f32 %v1528, %v1546
    %v1550 = vsub.f32 %v1529, %v1546
    %v1551 = vsub.f32 %v1530, %v1546
    %v1552 = vsub.f32 %v1531, %v1547
    %v1553 = vsub.f32 %v1532, %v1547
    %v1554 = vsub.f32 %v1533, %v1547
    %v1555 = vsub.f32 %v1534, %v1547
    %v1556 = vmul.f32 %v1548, %v1548
    %v1557 = vmul.f32 %v1549, %v1549
    %v1558 = vmul.f32 %v1550, %v1550
    %v1559 = vmul.f32 %v1551, %v1551
    %v1560 = vmul.f32 %v1552, %v1552
    %v1561 = vmul.f32 %v1553, %v1553
    %v1562 = vmul.f32 %v1554, %v1554
    %v1563 = vmul.f32 %v1555, %v1555
    %v1564 = vadd.f32 %v1556, %v1557
    %v1565 = vadd.f32 %v1564, %v1558
    %v1566 = vadd.f32 %v1565, %v1559
    %1567 = vadd.xlane.f32.xlu0 %v1566
    %v1568 = vpop.xlane.xlu0 %1567
    %v1569 = vadd.f32 %v1560, %v1561
    %v1570 = vadd.f32 %v1569, %v1562
    %v1571 = vadd.f32 %v1570, %v1563
    %1572 = vadd.xlane.f32.xlu0 %v1571
    %v1573 = vpop.xlane.xlu0 %1572
    %v1574 = vmul.f32 %v1568, %v1545
    %v1575 = vmul.f32 %v1573, %v1545
    %v1576 = vadd.f32 %v1574, 1e-05
    %v1577 = vadd.f32 %v1575, 1e-05
    %v1578 = vrsqrt.pop %v1576
    %v1579 = vrsqrt.pop %v1577
    %v1580 = vmul.f32 %v1548, %v1578
    %v1581 = vmul.f32 %v1549, %v1578
    %v1582 = vmul.f32 %v1550, %v1578
    %v1583 = vmul.f32 %v1551, %v1578
    %v1584 = vmul.f32 %v1552, %v1579
    %v1585 = vmul.f32 %v1553, %v1579
    %v1586 = vmul.f32 %v1554, %v1579
    %v1587 = vmul.f32 %v1555, %v1579
    %s1588 = scalar_lea.vmem %s3, 2
    %v1589 = vld [vmem:[%s1588] ss:$4 sm:$0xf]
    %v1591 = vlaneseq
    %v1592 = vshrl.u32 %v1591, 7
    %v1593 = vsub.s32 0, %v1592
    %v1594 = vrot.slane %v1589, %v1593
    %v1595 = vlaneseq
    %v1596 = vshrl.u32 %v1595, 7
    %v1597 = vsub.s32 1, %v1596
    %v1598 = vrot.slane %v1589, %v1597
    %v1599 = vlaneseq
    %v1600 = vshrl.u32 %v1599, 7
    %v1601 = vsub.s32 2, %v1600
    %v1602 = vrot.slane %v1589, %v1601
    %v1603 = vlaneseq
    %v1604 = vshrl.u32 %v1603, 7
    %v1605 = vsub.s32 3, %v1604
    %v1606 = vrot.slane %v1589, %v1605
    %v1611 = vmul.f32 %v1580, %v1594
    %v1612 = vmul.f32 %v1581, %v1598
    %v1613 = vmul.f32 %v1582, %v1602
    %v1614 = vmul.f32 %v1583, %v1606
    %v1615 = vmul.f32 %v1584, %v1594
    %v1616 = vmul.f32 %v1585, %v1598
    %v1617 = vmul.f32 %v1586, %v1602
    %v1618 = vmul.f32 %v1587, %v1606
    %s1619 = scalar_lea.vmem %s3, 3
    %v1620 = vld [vmem:[%s1619] ss:$4 sm:$0xf]
    %v1622 = vlaneseq
    %v1623 = vshrl.u32 %v1622, 7
    %v1624 = vsub.s32 0, %v1623
    %v1625 = vrot.slane %v1620, %v1624
    %v1626 = vlaneseq
    %v1627 = vshrl.u32 %v1626, 7
    %v1628 = vsub.s32 1, %v1627
    %v1629 = vrot.slane %v1620, %v1628
    %v1630 = vlaneseq
    %v1631 = vshrl.u32 %v1630, 7
    %v1632 = vsub.s32 2, %v1631
    %v1633 = vrot.slane %v1620, %v1632
    %v1634 = vlaneseq
    %v1635 = vshrl.u32 %v1634, 7
    %v1636 = vsub.s32 3, %v1635
    %v1637 = vrot.slane %v1620, %v1636
    %v1642 = vadd.f32 %v1611, %v1625
    %v1643 = vadd.f32 %v1612, %v1629
    %v1644 = vadd.f32 %v1613, %v1633
    %v1645 = vadd.f32 %v1614, %v1637
    %v1646 = vadd.f32 %v1615, %v1625
    %v1647 = vadd.f32 %v1616, %v1629
    %v1648 = vadd.f32 %v1617, %v1633
    %v1649 = vadd.f32 %v1618, %v1637
    %v1650 = vpack.c.bf16 %v1646, %v1642
    %v1651 = vpack.c.bf16 %v1647, %v1643
    %v1652 = vpack.c.bf16 %v1648, %v1644
    %v1653 = vpack.c.bf16 %v1649, %v1645
    %v1658 = vunpack.c.l.b16 %v1650
    %v1659 = vunpack.c.l.b16 %v1651
    %v1660 = vunpack.c.l.b16 %v1652
    %v1661 = vunpack.c.l.b16 %v1653
    %v1662 = vunpack.c.h.b16 %v1650
    %v1663 = vunpack.c.h.b16 %v1651
    %v1664 = vunpack.c.h.b16 %v1652
    %v1665 = vunpack.c.h.b16 %v1653
    %v1666 = vpack.c.b16 %v1659, %v1658
    %v1667 = vpack.c.b16 %v1661, %v1660
    %v1668 = vpack.c.b16 %v1663, %v1662
    %v1669 = vpack.c.b16 %v1665, %v1664
    %1674 = vst [vmem:[#allocation2] sm:$0xff] %v1666
    %1675 = vst [vmem:[#allocation2 + $0x8] sm:$0xff] %v1667
    %1676 = vst [vmem:[#allocation2 + $0x10] sm:$0xff] %v1668
    %1677 = vst [vmem:[#allocation2 + $0x18] sm:$0xff] %v1669
    // Predicated region
    $region18: #{multimodal_encoder_head.2} parent=1 // pred_check
      _
    $region19: #{multimodal_encoder_head.2} parent=1 // pred_check_branch
      %1679 = sbr.rel (0) target = $region21
    $region20: #{multimodal_encoder_head.2} parent=1 // pred_region
      %s1681 = ssub.s32 512, 512
      %1682 = vsyncadd [#allocation3], %s1681
      %s1683 = sshll.u32 [#allocation2], 4
      %s1684 = int_to_ptr.vmem [resolvable:$true] %s1683
      %1689 = dma.vmem_to_hbm [thread:$0]  %s1684, 512, %s4, [#allocation3], 256, 256, 16
    $region21: #{multimodal_encoder_head.2} parent=1 // pred_fallthru
      _
    // Predicated region
    $region22: #{multimodal_encoder_head.2} parent=1 // pred_check
      _
    $region23: #{multimodal_encoder_head.2} parent=1 // pred_check_branch
      %1691 = sbr.rel (0) target = $region25
    $region24: #{multimodal_encoder_head.2} parent=1 // pred_region
      %1692 = dma.done [#allocation3], 512
    $region25: #{multimodal_encoder_head.2} parent=1 // pred_fallthru
      _
    %1693 = vsyncpa [#allocation3], 1

</llo_original>
